<compile_context>
chip_gen: v7x
topology: tpu7x:2x2x1
jax: 0.10.0
libtpu: 0.0.40
codegen_flags: <defaults>
</compile_context>

<pallas_src>
import jax
import jax.numpy as jnp
import numpy as np
from jax.experimental import pallas as pl
from jax.experimental.pallas import tpu as pltpu


def _cdiv(a, b):
    return -(-a // b)


def _round_up(v, m):
    return _cdiv(v, m) * m


def _fourier_block_kernel(x_ref, x2_ref, f_ref, wr_ref, wi_ref,
                          gr_ref, gi_ref, cw_ref, cb_ref, o_ref):
    c_in, c_out, mp = wr_ref.shape
    c_in_bb, lp = x_ref.shape
    bb = c_in_bb // c_in

    x_rows = x_ref[...]                                    # (C_in*BB, Lp) bf16, rows (i, b)

    # (1) truncated rfft: one MXU matmul against the packed [cos | -sin] basis.
    xf = jnp.dot(x_rows, f_ref[...], preferred_element_type=jnp.float32)   # (C_in*BB, 2*Mp) f32

    # (2) per-mode complex channel mixing on the VPU in f32.  BB % 8 == 0 keeps
    #     every per-channel slice sublane-aligned (no relayout per iteration).
    # TODO(synk): at large C_in*C_out this VALU loop becomes the binding unit;
    #             move it onto the MXU as a mode-batched dot_general with the
    #             complex weights as [[wr, wi], [-wi, wr]] real blocks.
    yr = jnp.zeros((bb, c_out, mp), jnp.float32)
    yi = jnp.zeros((bb, c_out, mp), jnp.float32)
    for i in range(c_in):                                  # static, small
        xr_i = xf[i * bb:(i + 1) * bb, :mp][:, None, :]    # (BB, 1, Mp)
        xi_i = xf[i * bb:(i + 1) * bb, mp:][:, None, :]    # (BB, 1, Mp)
        wr_i = wr_ref[i][None, :, :]                       # (1, C_out, Mp)
        wi_i = wi_ref[i][None, :, :]
        yr = yr + xr_i * wr_i - xi_i * wi_i
        yi = yi + xr_i * wi_i + xi_i * wr_i

    # (3) truncated irfft: two accumulated MXU matmuls (no concat copy).
    yr2 = yr.reshape(bb * c_out, mp).astype(jnp.bfloat16)  # rows (b, o)
    yi2 = yi.reshape(bb * c_out, mp).astype(jnp.bfloat16)
    z = jnp.dot(yr2, gr_ref[...], preferred_element_type=jnp.float32)
    z = z + jnp.dot(yi2, gi_ref[...], preferred_element_type=jnp.float32)  # (BB*C_out, Lp) f32

    # (4) dense 1x1 conv: (C_out, C_in) @ (C_in, BB*Lp).  x2_ref is the same
    #     HBM bytes as x_ref with a different BlockSpec, so no in-kernel
    #     relayout / reshape across the lane boundary is ever needed.
    zc = jnp.dot(cw_ref[...], x2_ref[...], preferred_element_type=jnp.float32)  # (C_out, BB*Lp)

    # bias + tanh in f32.  Lp is a multiple of 128, so every store is
    # lane-dense; per-batch row / lane slices are tile-aligned.
    cb = cb_ref[...]                                       # (C_out, 1)
    for b in range(bb):                                    # static
        lo = b * c_out
        o_ref[lo:lo + c_out, :] = jnp.tanh(
            z[lo:lo + c_out, :] + zc[:, b * lp:(b + 1) * lp] + cb)


def fourier_block_forward(x, wr, wi, conv_w, conv_b, modes):
    """x: (B, C_in, L) f32; wr/wi: (C_in, C_out, M); conv_w: (C_out, C_in); conv_b: (C_out,)."""
    B, C_in, L = x.shape
    C_out = conv_w.shape[0]
    M = int(modes)
    assert M <= L // 2 + 1

    LANE, SUB = 128, 8
    Mp = _round_up(M, LANE)
    Lp = _round_up(L, LANE)

    # ---- per-generation scoped-VMEM budget (v5e/v6e 128 MiB -> ~96 MiB,
    #      v7x 64 MiB -> ~48 MiB; conservative fallback if the query fails).
    try:
        vmem_cap = int(pltpu.get_tpu_info().vmem_capacity_bytes)
    except Exception:
        vmem_cap = 64 * 1024 * 1024
    vmem_limit = int(min(vmem_cap * 3 // 4, 100 * 1024 * 1024))

    # ---- batch block: a multiple of 8 (sublane-aligned slices, free reshapes)
    #      and large enough to fill the MXU row dim (~256 rows on the narrower
    #      of C_in*BB / C_out*BB; >=128 already saturates v5e's 128x128 MXUs),
    #      capped by the batch size and a rough per-block VMEM estimate.
    rows_target = 256
    bb_cap = _round_up(max(1, _cdiv(rows_target, max(1, min(C_in, C_out)))), SUB)
    BB = max(SUB, min(_round_up(B, SUB), bb_cap))

    def _block_vmem_bytes(bb):
        x_blocks = 2 * (C_in * bb * Lp * 2) * 2            # two bf16 x views, double-buffered
        out_block = (C_out * bb * Lp * 4) * 2              # f32 output, double-buffered
        consts = (Lp * 2 * Mp) * 2 + 2 * (Mp * Lp) * 2 \
                 + 2 * (C_in * C_out * Mp) * 4             # single-buffered bases + weights
        live = bb * (2 * C_in * Mp + 4 * C_out * Mp + 2 * C_out * Lp) * 4   # xf / yr / yi / z
        return x_blocks + out_block + consts + live

    while BB > SUB and _block_vmem_bytes(BB) > (vmem_limit * 6) // 10:
        BB -= SUB

    Bp = _cdiv(B, BB) * BB
    n_blocks = Bp // BB
    # TODO(synk): on v7x (2 TensorCores) optionally cap BB so n_blocks >= 2 and
    #             the "parallel" axis shards across cores — but never below
    #             ~256 MXU rows.

    f32, bf16 = jnp.float32, jnp.bfloat16

    # ---- DFT bases built on host in float64 with the angle reduced mod L in
    #      integer arithmetic (exact for any L), cast once to bf16.
    n_idx = np.arange(Lp, dtype=np.int64)[:, None]
    k_idx = np.arange(Mp, dtype=np.int64)[None, :]
    theta_f = ((n_idx * k_idx) % L).astype(np.float64) * (2.0 * np.pi / L)
    k_mask = (np.arange(Mp) < M).astype(np.float64)[None, :]
    f_np = np.concatenate([np.cos(theta_f) * k_mask, -np.sin(theta_f) * k_mask], axis=1)
    f_cat = jnp.asarray(f_np, dtype=bf16)                                  # (Lp, 2*Mp)

    k_col = np.arange(Mp, dtype=np.int64)[:, None]
    l_row = np.arange(Lp, dtype=np.int64)[None, :]
    theta_g = ((k_col * l_row) % L).astype(np.float64) * (2.0 * np.pi / L)
    nyq = L // 2 if L % 2 == 0 else -1                     # Nyquist bin only exists for even L
    ks = np.arange(Mp)
    ck = np.where((ks == 0) | (ks == nyq), 1.0, 2.0) * (ks < M)
    gr = jnp.asarray((ck[:, None] * np.cos(theta_g)) / L, dtype=bf16)      # (Mp, Lp)
    gi = jnp.asarray((-ck[:, None] * np.sin(theta_g)) / L, dtype=bf16)     # (Mp, Lp)
    # TODO(synk): for large L/modes (bases approaching VMEM, esp. v7x 64 MiB)
    #             keep the bases in HBM (pl.ANY) and stream Lp tiles instead.

    # ---- spectral weights zero-padded to Mp lanes (f32: consumed by the VPU).
    wr_p = jnp.zeros((C_in, C_out, Mp), f32).at[:, :, :M].set(wr.astype(f32))
    wi_p = jnp.zeros((C_in, C_out, Mp), f32).at[:, :, :M].set(wi.astype(f32))

    # ---- dense 1x1-conv weight / bias.
    cw = conv_w.astype(bf16)                               # (C_out, C_in)
    cb = conv_b.astype(f32).reshape(C_out, 1)              # (C_out, 1)

    # ---- input: zero-pad batch & length, cast to bf16 (halves DMA), lay out
    #      each batch block with channel-major rows (i, b) so the kernel never
    #      regroups across the (possibly non-8-aligned) C_in axis.  The second
    #      view (n_blocks, C_in, BB*Lp) is the same buffer, only a reshape.
    # TODO(synk): when C_in % 8 == 0 the transpose can be skipped by passing
    #             native (B, C_in, Lp) with a 3-D BlockSpec.
    x_p = jnp.zeros((Bp, C_in, Lp), bf16).at[:B, :, :L].set(x.astype(bf16))
    x_cm = (x_p.reshape(n_blocks, BB, C_in, Lp)
                .transpose(0, 2, 1, 3)
                .reshape(n_blocks * C_in * BB, Lp))
    x_cm2 = x_cm.reshape(n_blocks, C_in, BB * Lp)

    single = pl.Buffered(1)                                # grid-invariant inputs: one buffer

    out2d = pl.pallas_call(
        _fourier_block_kernel,
        out_shape=jax.ShapeDtypeStruct((Bp * C_out, Lp), f32),
        grid_spec=pltpu.PrefetchScalarGridSpec(
            num_scalar_prefetch=0,
            grid=(n_blocks,),
            in_specs=[
                pl.BlockSpec((C_in * BB, Lp), lambda g: (g, 0)),                  # x, rows (i, b)
                pl.BlockSpec((None, C_in, BB * Lp), lambda g: (g, 0, 0)),         # same bytes, conv view
                pl.BlockSpec((Lp, 2 * Mp), lambda g: (0, 0), pipeline_mode=single),           # rfft basis
                pl.BlockSpec((C_in, C_out, Mp), lambda g: (0, 0, 0), pipeline_mode=single),   # W real
                pl.BlockSpec((C_in, C_out, Mp), lambda g: (0, 0, 0), pipeline_mode=single),   # W imag
                pl.BlockSpec((Mp, Lp), lambda g: (0, 0), pipeline_mode=single),   # irfft basis (real)
                pl.BlockSpec((Mp, Lp), lambda g: (0, 0), pipeline_mode=single),   # irfft basis (imag)
                pl.BlockSpec((C_out, C_in), lambda g: (0, 0), pipeline_mode=single),          # conv W
                pl.BlockSpec((C_out, 1), lambda g: (0, 0), pipeline_mode=single),             # conv b
            ],
            out_specs=pl.BlockSpec((BB * C_out, Lp), lambda g: (g, 0)),
        ),
        compiler_params=pltpu.CompilerParams(
            dimension_semantics=("parallel",),
            vmem_limit_bytes=vmem_limit,
        ),
    )(x_cm, x_cm2, f_cat, wr_p, wi_p, gr, gi, cw, cb)

    return out2d.reshape(Bp, C_out, Lp)[:B, :, :L]


def fourier_block_reference(x, wr, wi, conv_w, conv_b, modes):
    """Pure-JAX reference mirroring the PyTorch FourierBlock forward."""
    B, C_in, L = x.shape
    C_out = conv_w.shape[0]
    w = (wr + 1j * wi).astype(jnp.complex64)
    x_ft = jnp.fft.rfft(x, axis=-1)                                   # (B, C_in, L//2+1)
    mixed = jnp.einsum('bik,iok->bok', x_ft[:, :, :modes], w)         # (B, C_out, modes)
    out_ft = jnp.zeros((B, C_out, L // 2 + 1), dtype=jnp.complex64)
    out_ft = out_ft.at[:, :, :modes].set(mixed)
    x_spec = jnp.fft.irfft(out_ft, n=L, axis=-1)                      # (B, C_out, L)
    x_conv = jnp.einsum('oi,bil->bol', conv_w, x) + conv_b[None, :, None]
    return jnp.tanh(x_spec + x_conv)


if __name__ == "__main__":
    B, C_in, C_out, L, modes = 4, 4, 8, 16, 5

    key = jax.random.PRNGKey(0)
    k1, k2, k3, k4, k5 = jax.random.split(key, 5)

    x = jax.random.normal(k1, (B, C_in, L), dtype=jnp.float32)

    # SpectralConvolution weights: scale * rand(C_in, C_out, modes), complex parts.
    scale = 1.0 / (C_in * C_out)
    wr = scale * jax.random.uniform(k2, (C_in, C_out, modes), dtype=jnp.float32)
    wi = scale * jax.random.uniform(k3, (C_in, C_out, modes), dtype=jnp.float32)

    # Conv1d(C_in, C_out, kernel_size=1): xavier_uniform weight, default bias init.
    bound_w = float(np.sqrt(6.0 / (C_in + C_out)))
    conv_w = jax.random.uniform(k4, (C_out, C_in), dtype=jnp.float32,
                                minval=-bound_w, maxval=bound_w)
    bound_b = 1.0 / float(np.sqrt(C_in))
    conv_b = jax.random.uniform(k5, (C_out,), dtype=jnp.float32,
                                minval=-bound_b, maxval=bound_b)

    out = jax.block_until_ready(fourier_block_forward(x, wr, wi, conv_w, conv_b, modes))
    ref = jax.block_until_ready(fourier_block_reference(x, wr, wi, conv_w, conv_b, modes))

    assert out.shape == (B, C_out, L), out.shape
    # bf16 MXU operands (f32 accumulation) vs an exact-FFT f32 reference.
    np.testing.assert_allclose(np.asarray(out), np.asarray(ref), atol=3e-2, rtol=3e-2)

    print("KERNEL_OK")
</pallas_src>

<mosaic_0001>
module attributes {stable_mosaic.version = 11 : i64} {
  func.func @_fourier_block_kernel(%arg0: i32, %arg1: memref<32x128xbf16, #tpu.memory_space<vmem>>, %arg2: memref<1x4x1024xbf16, #tpu.memory_space<vmem>>, %arg3: memref<128x256xbf16, #tpu.memory_space<vmem>>, %arg4: memref<4x8x128xf32, #tpu.memory_space<vmem>>, %arg5: memref<4x8x128xf32, #tpu.memory_space<vmem>>, %arg6: memref<128x128xbf16, #tpu.memory_space<vmem>>, %arg7: memref<128x128xbf16, #tpu.memory_space<vmem>>, %arg8: memref<8x4xbf16, #tpu.memory_space<vmem>>, %arg9: memref<8x1xf32, #tpu.memory_space<vmem>>, %arg10: memref<64x128xf32, #tpu.memory_space<vmem>>) attributes {dimension_semantics = [#tpu.dimension_semantics<parallel>], iteration_bounds = array<i64: 1>, scalar_prefetch = 0 : i64, scratch_operands = 0 : i64, tpu.core_type = #tpu.core_type<tc>, window_params = [{transform_indices = @transform_0, window_bounds = array<i64: 32, 128>}, {transform_indices = @transform_1, window_bounds = array<i64: 1, 4, 1024>}, {pipeline_mode = #tpu.pipeline_mode<synchronous>, transform_indices = @transform_2, window_bounds = array<i64: 128, 256>}, {pipeline_mode = #tpu.pipeline_mode<synchronous>, transform_indices = @transform_3, window_bounds = array<i64: 4, 8, 128>}, {pipeline_mode = #tpu.pipeline_mode<synchronous>, transform_indices = @transform_4, window_bounds = array<i64: 4, 8, 128>}, {pipeline_mode = #tpu.pipeline_mode<synchronous>, transform_indices = @transform_5, window_bounds = array<i64: 128, 128>}, {pipeline_mode = #tpu.pipeline_mode<synchronous>, transform_indices = @transform_6, window_bounds = array<i64: 128, 128>}, {pipeline_mode = #tpu.pipeline_mode<synchronous>, transform_indices = @transform_7, window_bounds = array<i64: 8, 4>}, {pipeline_mode = #tpu.pipeline_mode<synchronous>, transform_indices = @transform_8, window_bounds = array<i64: 8, 1>}, {transform_indices = @transform_9, window_bounds = array<i64: 64, 128>}]} {
    %c0 = arith.constant 0 : index
    %c0_0 = arith.constant 0 : index
    %0 = vector.load %arg1[%c0, %c0_0] : memref<32x128xbf16, #tpu.memory_space<vmem>>, vector<32x128xbf16>
    %c0_1 = arith.constant 0 : index
    %c0_2 = arith.constant 0 : index
    %1 = vector.load %arg3[%c0_1, %c0_2] : memref<128x256xbf16, #tpu.memory_space<vmem>>, vector<128x256xbf16>
    %cst = arith.constant dense<0.000000e+00> : vector<32x256xf32>
    %2 = tpu.matmul %0, %1, %cst {dimension_numbers = #tpu.dot_dimension_numbers<[1], [0], [0], [1], [0, 0, 1, 1], [], []>} : vector<32x128xbf16>, vector<128x256xbf16>, vector<32x256xf32> -> vector<32x256xf32>
    %cst_3 = arith.constant 0.000000e+00 : f32
    %3 = vector.broadcast %cst_3 : f32 to vector<8x8x128xf32>
    %cst_4 = arith.constant 0.000000e+00 : f32
    %4 = vector.broadcast %cst_4 : f32 to vector<8x8x128xf32>
    %5 = vector.extract_strided_slice %2 {offsets = [0, 0], sizes = [8, 128], strides = [1, 1]} : vector<32x256xf32> to vector<8x128xf32>
    %6 = vector.shape_cast %5 : vector<8x128xf32> to vector<8x1x128xf32>
    %7 = vector.extract_strided_slice %2 {offsets = [0, 128], sizes = [8, 128], strides = [1, 1]} : vector<32x256xf32> to vector<8x128xf32>
    %8 = vector.shape_cast %7 : vector<8x128xf32> to vector<8x1x128xf32>
    %c0_5 = arith.constant 0 : index
    %c0_6 = arith.constant 0 : index
    %c0_7 = arith.constant 0 : index
    %9 = vector.load %arg4[%c0_5, %c0_6, %c0_7] : memref<4x8x128xf32, #tpu.memory_space<vmem>>, vector<1x8x128xf32>
    %10 = vector.shape_cast %9 : vector<1x8x128xf32> to vector<8x128xf32>
    %11 = vector.shape_cast %10 : vector<8x128xf32> to vector<1x8x128xf32>
    %c0_8 = arith.constant 0 : index
    %c0_9 = arith.constant 0 : index
    %c0_10 = arith.constant 0 : index
    %12 = vector.load %arg5[%c0_8, %c0_9, %c0_10] : memref<4x8x128xf32, #tpu.memory_space<vmem>>, vector<1x8x128xf32>
    %13 = vector.shape_cast %12 : vector<1x8x128xf32> to vector<8x128xf32>
    %14 = vector.shape_cast %13 : vector<8x128xf32> to vector<1x8x128xf32>
    %15 = vector.broadcast %6 : vector<8x1x128xf32> to vector<8x8x128xf32>
    %16 = vector.broadcast %11 : vector<1x8x128xf32> to vector<8x8x128xf32>
    %17 = arith.mulf %15, %16 : vector<8x8x128xf32>
    %18 = arith.addf %3, %17 : vector<8x8x128xf32>
    %19 = vector.broadcast %8 : vector<8x1x128xf32> to vector<8x8x128xf32>
    %20 = vector.broadcast %14 : vector<1x8x128xf32> to vector<8x8x128xf32>
    %21 = arith.mulf %19, %20 : vector<8x8x128xf32>
    %22 = arith.subf %18, %21 : vector<8x8x128xf32>
    %23 = vector.broadcast %6 : vector<8x1x128xf32> to vector<8x8x128xf32>
    %24 = vector.broadcast %14 : vector<1x8x128xf32> to vector<8x8x128xf32>
    %25 = arith.mulf %23, %24 : vector<8x8x128xf32>
    %26 = arith.addf %4, %25 : vector<8x8x128xf32>
    %27 = vector.broadcast %8 : vector<8x1x128xf32> to vector<8x8x128xf32>
    %28 = vector.broadcast %11 : vector<1x8x128xf32> to vector<8x8x128xf32>
    %29 = arith.mulf %27, %28 : vector<8x8x128xf32>
    %30 = arith.addf %26, %29 : vector<8x8x128xf32>
    %31 = vector.extract_strided_slice %2 {offsets = [8, 0], sizes = [8, 128], strides = [1, 1]} : vector<32x256xf32> to vector<8x128xf32>
    %32 = vector.shape_cast %31 : vector<8x128xf32> to vector<8x1x128xf32>
    %33 = vector.extract_strided_slice %2 {offsets = [8, 128], sizes = [8, 128], strides = [1, 1]} : vector<32x256xf32> to vector<8x128xf32>
    %34 = vector.shape_cast %33 : vector<8x128xf32> to vector<8x1x128xf32>
    %c1 = arith.constant 1 : index
    %c0_11 = arith.constant 0 : index
    %c0_12 = arith.constant 0 : index
    %35 = vector.load %arg4[%c1, %c0_11, %c0_12] : memref<4x8x128xf32, #tpu.memory_space<vmem>>, vector<1x8x128xf32>
    %36 = vector.shape_cast %35 : vector<1x8x128xf32> to vector<8x128xf32>
    %37 = vector.shape_cast %36 : vector<8x128xf32> to vector<1x8x128xf32>
    %c1_13 = arith.constant 1 : index
    %c0_14 = arith.constant 0 : index
    %c0_15 = arith.constant 0 : index
    %38 = vector.load %arg5[%c1_13, %c0_14, %c0_15] : memref<4x8x128xf32, #tpu.memory_space<vmem>>, vector<1x8x128xf32>
    %39 = vector.shape_cast %38 : vector<1x8x128xf32> to vector<8x128xf32>
    %40 = vector.shape_cast %39 : vector<8x128xf32> to vector<1x8x128xf32>
    %41 = vector.broadcast %32 : vector<8x1x128xf32> to vector<8x8x128xf32>
    %42 = vector.broadcast %37 : vector<1x8x128xf32> to vector<8x8x128xf32>
    %43 = arith.mulf %41, %42 : vector<8x8x128xf32>
    %44 = arith.addf %22, %43 : vector<8x8x128xf32>
    %45 = vector.broadcast %34 : vector<8x1x128xf32> to vector<8x8x128xf32>
    %46 = vector.broadcast %40 : vector<1x8x128xf32> to vector<8x8x128xf32>
    %47 = arith.mulf %45, %46 : vector<8x8x128xf32>
    %48 = arith.subf %44, %47 : vector<8x8x128xf32>
    %49 = vector.broadcast %32 : vector<8x1x128xf32> to vector<8x8x128xf32>
    %50 = vector.broadcast %40 : vector<1x8x128xf32> to vector<8x8x128xf32>
    %51 = arith.mulf %49, %50 : vector<8x8x128xf32>
    %52 = arith.addf %30, %51 : vector<8x8x128xf32>
    %53 = vector.broadcast %34 : vector<8x1x128xf32> to vector<8x8x128xf32>
    %54 = vector.broadcast %37 : vector<1x8x128xf32> to vector<8x8x128xf32>
    %55 = arith.mulf %53, %54 : vector<8x8x128xf32>
    %56 = arith.addf %52, %55 : vector<8x8x128xf32>
    %57 = vector.extract_strided_slice %2 {offsets = [16, 0], sizes = [8, 128], strides = [1, 1]} : vector<32x256xf32> to vector<8x128xf32>
    %58 = vector.shape_cast %57 : vector<8x128xf32> to vector<8x1x128xf32>
    %59 = vector.extract_strided_slice %2 {offsets = [16, 128], sizes = [8, 128], strides = [1, 1]} : vector<32x256xf32> to vector<8x128xf32>
    %60 = vector.shape_cast %59 : vector<8x128xf32> to vector<8x1x128xf32>
    %c2 = arith.constant 2 : index
    %c0_16 = arith.constant 0 : index
    %c0_17 = arith.constant 0 : index
    %61 = vector.load %arg4[%c2, %c0_16, %c0_17] : memref<4x8x128xf32, #tpu.memory_space<vmem>>, vector<1x8x128xf32>
    %62 = vector.shape_cast %61 : vector<1x8x128xf32> to vector<8x128xf32>
    %63 = vector.shape_cast %62 : vector<8x128xf32> to vector<1x8x128xf32>
    %c2_18 = arith.constant 2 : index
    %c0_19 = arith.constant 0 : index
    %c0_20 = arith.constant 0 : index
    %64 = vector.load %arg5[%c2_18, %c0_19, %c0_20] : memref<4x8x128xf32, #tpu.memory_space<vmem>>, vector<1x8x128xf32>
    %65 = vector.shape_cast %64 : vector<1x8x128xf32> to vector<8x128xf32>
    %66 = vector.shape_cast %65 : vector<8x128xf32> to vector<1x8x128xf32>
    %67 = vector.broadcast %58 : vector<8x1x128xf32> to vector<8x8x128xf32>
    %68 = vector.broadcast %63 : vector<1x8x128xf32> to vector<8x8x128xf32>
    %69 = arith.mulf %67, %68 : vector<8x8x128xf32>
    %70 = arith.addf %48, %69 : vector<8x8x128xf32>
    %71 = vector.broadcast %60 : vector<8x1x128xf32> to vector<8x8x128xf32>
    %72 = vector.broadcast %66 : vector<1x8x128xf32> to vector<8x8x128xf32>
    %73 = arith.mulf %71, %72 : vector<8x8x128xf32>
    %74 = arith.subf %70, %73 : vector<8x8x128xf32>
    %75 = vector.broadcast %58 : vector<8x1x128xf32> to vector<8x8x128xf32>
    %76 = vector.broadcast %66 : vector<1x8x128xf32> to vector<8x8x128xf32>
    %77 = arith.mulf %75, %76 : vector<8x8x128xf32>
    %78 = arith.addf %56, %77 : vector<8x8x128xf32>
    %79 = vector.broadcast %60 : vector<8x1x128xf32> to vector<8x8x128xf32>
    %80 = vector.broadcast %63 : vector<1x8x128xf32> to vector<8x8x128xf32>
    %81 = arith.mulf %79, %80 : vector<8x8x128xf32>
    %82 = arith.addf %78, %81 : vector<8x8x128xf32>
    %83 = vector.extract_strided_slice %2 {offsets = [24, 0], sizes = [8, 128], strides = [1, 1]} : vector<32x256xf32> to vector<8x128xf32>
    %84 = vector.shape_cast %83 : vector<8x128xf32> to vector<8x1x128xf32>
    %85 = vector.extract_strided_slice %2 {offsets = [24, 128], sizes = [8, 128], strides = [1, 1]} : vector<32x256xf32> to vector<8x128xf32>
    %86 = vector.shape_cast %85 : vector<8x128xf32> to vector<8x1x128xf32>
    %c3 = arith.constant 3 : index
    %c0_21 = arith.constant 0 : index
    %c0_22 = arith.constant 0 : index
    %87 = vector.load %arg4[%c3, %c0_21, %c0_22] : memref<4x8x128xf32, #tpu.memory_space<vmem>>, vector<1x8x128xf32>
    %88 = vector.shape_cast %87 : vector<1x8x128xf32> to vector<8x128xf32>
    %89 = vector.shape_cast %88 : vector<8x128xf32> to vector<1x8x128xf32>
    %c3_23 = arith.constant 3 : index
    %c0_24 = arith.constant 0 : index
    %c0_25 = arith.constant 0 : index
    %90 = vector.load %arg5[%c3_23, %c0_24, %c0_25] : memref<4x8x128xf32, #tpu.memory_space<vmem>>, vector<1x8x128xf32>
    %91 = vector.shape_cast %90 : vector<1x8x128xf32> to vector<8x128xf32>
    %92 = vector.shape_cast %91 : vector<8x128xf32> to vector<1x8x128xf32>
    %93 = vector.broadcast %84 : vector<8x1x128xf32> to vector<8x8x128xf32>
    %94 = vector.broadcast %89 : vector<1x8x128xf32> to vector<8x8x128xf32>
    %95 = arith.mulf %93, %94 : vector<8x8x128xf32>
    %96 = arith.addf %74, %95 : vector<8x8x128xf32>
    %97 = vector.broadcast %86 : vector<8x1x128xf32> to vector<8x8x128xf32>
    %98 = vector.broadcast %92 : vector<1x8x128xf32> to vector<8x8x128xf32>
    %99 = arith.mulf %97, %98 : vector<8x8x128xf32>
    %100 = arith.subf %96, %99 : vector<8x8x128xf32>
    %101 = vector.broadcast %84 : vector<8x1x128xf32> to vector<8x8x128xf32>
    %102 = vector.broadcast %92 : vector<1x8x128xf32> to vector<8x8x128xf32>
    %103 = arith.mulf %101, %102 : vector<8x8x128xf32>
    %104 = arith.addf %82, %103 : vector<8x8x128xf32>
    %105 = vector.broadcast %86 : vector<8x1x128xf32> to vector<8x8x128xf32>
    %106 = vector.broadcast %89 : vector<1x8x128xf32> to vector<8x8x128xf32>
    %107 = arith.mulf %105, %106 : vector<8x8x128xf32>
    %108 = arith.addf %104, %107 : vector<8x8x128xf32>
    %109 = vector.shape_cast %100 : vector<8x8x128xf32> to vector<64x128xf32>
    %110 = arith.truncf %109 : vector<64x128xf32> to vector<64x128xbf16>
    %111 = vector.shape_cast %108 : vector<8x8x128xf32> to vector<64x128xf32>
    %112 = arith.truncf %111 : vector<64x128xf32> to vector<64x128xbf16>
    %c0_26 = arith.constant 0 : index
    %c0_27 = arith.constant 0 : index
    %113 = vector.load %arg6[%c0_26, %c0_27] : memref<128x128xbf16, #tpu.memory_space<vmem>>, vector<128x128xbf16>
    %cst_28 = arith.constant dense<0.000000e+00> : vector<64x128xf32>
    %114 = tpu.matmul %110, %113, %cst_28 {dimension_numbers = #tpu.dot_dimension_numbers<[1], [0], [0], [1], [0, 0, 1, 1], [], []>} : vector<64x128xbf16>, vector<128x128xbf16>, vector<64x128xf32> -> vector<64x128xf32>
    %c0_29 = arith.constant 0 : index
    %c0_30 = arith.constant 0 : index
    %115 = vector.load %arg7[%c0_29, %c0_30] : memref<128x128xbf16, #tpu.memory_space<vmem>>, vector<128x128xbf16>
    %cst_31 = arith.constant dense<0.000000e+00> : vector<64x128xf32>
    %116 = tpu.matmul %112, %115, %cst_31 {dimension_numbers = #tpu.dot_dimension_numbers<[1], [0], [0], [1], [0, 0, 1, 1], [], []>} : vector<64x128xbf16>, vector<128x128xbf16>, vector<64x128xf32> -> vector<64x128xf32>
    %117 = arith.addf %114, %116 : vector<64x128xf32>
    %c0_32 = arith.constant 0 : index
    %c0_33 = arith.constant 0 : index
    %118 = vector.load %arg8[%c0_32, %c0_33] : memref<8x4xbf16, #tpu.memory_space<vmem>>, vector<8x4xbf16>
    %c0_34 = arith.constant 0 : index
    %c0_35 = arith.constant 0 : index
    %c0_36 = arith.constant 0 : index
    %119 = vector.load %arg2[%c0_34, %c0_35, %c0_36] : memref<1x4x1024xbf16, #tpu.memory_space<vmem>>, vector<1x4x1024xbf16>
    %120 = vector.shape_cast %119 : vector<1x4x1024xbf16> to vector<4x1024xbf16>
    %cst_37 = arith.constant dense<0.000000e+00> : vector<8x1024xf32>
    %121 = tpu.matmul %118, %120, %cst_37 {dimension_numbers = #tpu.dot_dimension_numbers<[1], [0], [0], [1], [0, 0, 1, 1], [], []>} : vector<8x4xbf16>, vector<4x1024xbf16>, vector<8x1024xf32> -> vector<8x1024xf32>
    %c0_38 = arith.constant 0 : index
    %c0_39 = arith.constant 0 : index
    %122 = vector.load %arg9[%c0_38, %c0_39] : memref<8x1xf32, #tpu.memory_space<vmem>>, vector<8x1xf32>
    %123 = vector.extract_strided_slice %117 {offsets = [0, 0], sizes = [8, 128], strides = [1, 1]} : vector<64x128xf32> to vector<8x128xf32>
    %124 = vector.extract_strided_slice %121 {offsets = [0, 0], sizes = [8, 128], strides = [1, 1]} : vector<8x1024xf32> to vector<8x128xf32>
    %125 = arith.addf %123, %124 : vector<8x128xf32>
    %126 = vector.broadcast %122 : vector<8x1xf32> to vector<8x128xf32>
    %127 = arith.addf %125, %126 : vector<8x128xf32>
    %128 = math.tanh %127 : vector<8x128xf32>
    %c0_40 = arith.constant 0 : index
    %c0_41 = arith.constant 0 : index
    %129 = vector.load %arg10[%c0_40, %c0_41] : memref<64x128xf32, #tpu.memory_space<vmem>>, vector<8x128xf32>
    tpu.vector_store %arg10[%c0_40, %c0_41], %128 {strides = array<i32>} : memref<64x128xf32, #tpu.memory_space<vmem>>, vector<8x128xf32>,
    %130 = vector.extract_strided_slice %117 {offsets = [8, 0], sizes = [8, 128], strides = [1, 1]} : vector<64x128xf32> to vector<8x128xf32>
    %131 = vector.extract_strided_slice %121 {offsets = [0, 128], sizes = [8, 128], strides = [1, 1]} : vector<8x1024xf32> to vector<8x128xf32>
    %132 = arith.addf %130, %131 : vector<8x128xf32>
    %133 = vector.broadcast %122 : vector<8x1xf32> to vector<8x128xf32>
    %134 = arith.addf %132, %133 : vector<8x128xf32>
    %135 = math.tanh %134 : vector<8x128xf32>
    %c8 = arith.constant 8 : index
    %c0_42 = arith.constant 0 : index
    %136 = vector.load %arg10[%c8, %c0_42] : memref<64x128xf32, #tpu.memory_space<vmem>>, vector<8x128xf32>
    tpu.vector_store %arg10[%c8, %c0_42], %135 {strides = array<i32>} : memref<64x128xf32, #tpu.memory_space<vmem>>, vector<8x128xf32>,
    %137 = vector.extract_strided_slice %117 {offsets = [16, 0], sizes = [8, 128], strides = [1, 1]} : vector<64x128xf32> to vector<8x128xf32>
    %138 = vector.extract_strided_slice %121 {offsets = [0, 256], sizes = [8, 128], strides = [1, 1]} : vector<8x1024xf32> to vector<8x128xf32>
    %139 = arith.addf %137, %138 : vector<8x128xf32>
    %140 = vector.broadcast %122 : vector<8x1xf32> to vector<8x128xf32>
    %141 = arith.addf %139, %140 : vector<8x128xf32>
    %142 = math.tanh %141 : vector<8x128xf32>
    %c16 = arith.constant 16 : index
    %c0_43 = arith.constant 0 : index
    %143 = vector.load %arg10[%c16, %c0_43] : memref<64x128xf32, #tpu.memory_space<vmem>>, vector<8x128xf32>
    tpu.vector_store %arg10[%c16, %c0_43], %142 {strides = array<i32>} : memref<64x128xf32, #tpu.memory_space<vmem>>, vector<8x128xf32>,
    %144 = vector.extract_strided_slice %117 {offsets = [24, 0], sizes = [8, 128], strides = [1, 1]} : vector<64x128xf32> to vector<8x128xf32>
    %145 = vector.extract_strided_slice %121 {offsets = [0, 384], sizes = [8, 128], strides = [1, 1]} : vector<8x1024xf32> to vector<8x128xf32>
    %146 = arith.addf %144, %145 : vector<8x128xf32>
    %147 = vector.broadcast %122 : vector<8x1xf32> to vector<8x128xf32>
    %148 = arith.addf %146, %147 : vector<8x128xf32>
    %149 = math.tanh %148 : vector<8x128xf32>
    %c24 = arith.constant 24 : index
    %c0_44 = arith.constant 0 : index
    %150 = vector.load %arg10[%c24, %c0_44] : memref<64x128xf32, #tpu.memory_space<vmem>>, vector<8x128xf32>
    tpu.vector_store %arg10[%c24, %c0_44], %149 {strides = array<i32>} : memref<64x128xf32, #tpu.memory_space<vmem>>, vector<8x128xf32>,
    %151 = vector.extract_strided_slice %117 {offsets = [32, 0], sizes = [8, 128], strides = [1, 1]} : vector<64x128xf32> to vector<8x128xf32>
    %152 = vector.extract_strided_slice %121 {offsets = [0, 512], sizes = [8, 128], strides = [1, 1]} : vector<8x1024xf32> to vector<8x128xf32>
    %153 = arith.addf %151, %152 : vector<8x128xf32>
    %154 = vector.broadcast %122 : vector<8x1xf32> to vector<8x128xf32>
    %155 = arith.addf %153, %154 : vector<8x128xf32>
    %156 = math.tanh %155 : vector<8x128xf32>
    %c32 = arith.constant 32 : index
    %c0_45 = arith.constant 0 : index
    %157 = vector.load %arg10[%c32, %c0_45] : memref<64x128xf32, #tpu.memory_space<vmem>>, vector<8x128xf32>
    tpu.vector_store %arg10[%c32, %c0_45], %156 {strides = array<i32>} : memref<64x128xf32, #tpu.memory_space<vmem>>, vector<8x128xf32>,
    %158 = vector.extract_strided_slice %117 {offsets = [40, 0], sizes = [8, 128], strides = [1, 1]} : vector<64x128xf32> to vector<8x128xf32>
    %159 = vector.extract_strided_slice %121 {offsets = [0, 640], sizes = [8, 128], strides = [1, 1]} : vector<8x1024xf32> to vector<8x128xf32>
    %160 = arith.addf %158, %159 : vector<8x128xf32>
    %161 = vector.broadcast %122 : vector<8x1xf32> to vector<8x128xf32>
    %162 = arith.addf %160, %161 : vector<8x128xf32>
    %163 = math.tanh %162 : vector<8x128xf32>
    %c40 = arith.constant 40 : index
    %c0_46 = arith.constant 0 : index
    %164 = vector.load %arg10[%c40, %c0_46] : memref<64x128xf32, #tpu.memory_space<vmem>>, vector<8x128xf32>
    tpu.vector_store %arg10[%c40, %c0_46], %163 {strides = array<i32>} : memref<64x128xf32, #tpu.memory_space<vmem>>, vector<8x128xf32>,
    %165 = vector.extract_strided_slice %117 {offsets = [48, 0], sizes = [8, 128], strides = [1, 1]} : vector<64x128xf32> to vector<8x128xf32>
    %166 = vector.extract_strided_slice %121 {offsets = [0, 768], sizes = [8, 128], strides = [1, 1]} : vector<8x1024xf32> to vector<8x128xf32>
    %167 = arith.addf %165, %166 : vector<8x128xf32>
    %168 = vector.broadcast %122 : vector<8x1xf32> to vector<8x128xf32>
    %169 = arith.addf %167, %168 : vector<8x128xf32>
    %170 = math.tanh %169 : vector<8x128xf32>
    %c48 = arith.constant 48 : index
    %c0_47 = arith.constant 0 : index
    %171 = vector.load %arg10[%c48, %c0_47] : memref<64x128xf32, #tpu.memory_space<vmem>>, vector<8x128xf32>
    tpu.vector_store %arg10[%c48, %c0_47], %170 {strides = array<i32>} : memref<64x128xf32, #tpu.memory_space<vmem>>, vector<8x128xf32>,
    %172 = vector.extract_strided_slice %117 {offsets = [56, 0], sizes = [8, 128], strides = [1, 1]} : vector<64x128xf32> to vector<8x128xf32>
    %173 = vector.extract_strided_slice %121 {offsets = [0, 896], sizes = [8, 128], strides = [1, 1]} : vector<8x1024xf32> to vector<8x128xf32>
    %174 = arith.addf %172, %173 : vector<8x128xf32>
    %175 = vector.broadcast %122 : vector<8x1xf32> to vector<8x128xf32>
    %176 = arith.addf %174, %175 : vector<8x128xf32>
    %177 = math.tanh %176 : vector<8x128xf32>
    %c56 = arith.constant 56 : index
    %c0_48 = arith.constant 0 : index
    %178 = vector.load %arg10[%c56, %c0_48] : memref<64x128xf32, #tpu.memory_space<vmem>>, vector<8x128xf32>
    tpu.vector_store %arg10[%c56, %c0_48], %177 {strides = array<i32>} : memref<64x128xf32, #tpu.memory_space<vmem>>, vector<8x128xf32>,
    return
  }
  func.func @transform_0(%arg0: i32) -> (i32, i32) {
    %c0_i32 = arith.constant 0 : i32
    %c0_i32_0 = arith.constant 0 : i32
    return %arg0, %c0_i32 : i32, i32
  }
  func.func @transform_1(%arg0: i32) -> (i32, i32, i32) {
    %c0_i32 = arith.constant 0 : i32
    %c0_i32_0 = arith.constant 0 : i32
    %c0_i32_1 = arith.constant 0 : i32
    return %arg0, %c0_i32, %c0_i32_0 : i32, i32, i32
  }
  func.func @transform_2(%arg0: i32) -> (i32, i32) {
    %c0_i32 = arith.constant 0 : i32
    %c0_i32_0 = arith.constant 0 : i32
    %c0_i32_1 = arith.constant 0 : i32
    return %c0_i32, %c0_i32_0 : i32, i32
  }
  func.func @transform_3(%arg0: i32) -> (i32, i32, i32) {
    %c0_i32 = arith.constant 0 : i32
    %c0_i32_0 = arith.constant 0 : i32
    %c0_i32_1 = arith.constant 0 : i32
    %c0_i32_2 = arith.constant 0 : i32
    return %c0_i32, %c0_i32_0, %c0_i32_1 : i32, i32, i32
  }
  func.func @transform_4(%arg0: i32) -> (i32, i32, i32) {
    %c0_i32 = arith.constant 0 : i32
    %c0_i32_0 = arith.constant 0 : i32
    %c0_i32_1 = arith.constant 0 : i32
    %c0_i32_2 = arith.constant 0 : i32
    return %c0_i32, %c0_i32_0, %c0_i32_1 : i32, i32, i32
  }
  func.func @transform_5(%arg0: i32) -> (i32, i32) {
    %c0_i32 = arith.constant 0 : i32
    %c0_i32_0 = arith.constant 0 : i32
    %c0_i32_1 = arith.constant 0 : i32
    return %c0_i32, %c0_i32_0 : i32, i32
  }
  func.func @transform_6(%arg0: i32) -> (i32, i32) {
    %c0_i32 = arith.constant 0 : i32
    %c0_i32_0 = arith.constant 0 : i32
    %c0_i32_1 = arith.constant 0 : i32
    return %c0_i32, %c0_i32_0 : i32, i32
  }
  func.func @transform_7(%arg0: i32) -> (i32, i32) {
    %c0_i32 = arith.constant 0 : i32
    %c0_i32_0 = arith.constant 0 : i32
    %c0_i32_1 = arith.constant 0 : i32
    return %c0_i32, %c0_i32_0 : i32, i32
  }
  func.func @transform_8(%arg0: i32) -> (i32, i32) {
    %c0_i32 = arith.constant 0 : i32
    %c0_i32_0 = arith.constant 0 : i32
    %c0_i32_1 = arith.constant 0 : i32
    return %c0_i32, %c0_i32_0 : i32, i32
  }
  func.func @transform_9(%arg0: i32) -> (i32, i32) {
    %c0_i32 = arith.constant 0 : i32
    %c0_i32_0 = arith.constant 0 : i32
    return %arg0, %c0_i32 : i32, i32
  }
}

</mosaic_0001>

<llo_original>
// kernel: tpu_custom_call.1
$region0: #{tpu_custom_call.1}
  #allocation0 [shape = 'u32[]', space=smem, size = 0x4, offset = 0x4, fixed_abs, tag = 'smem constant byte address 0x4 - core index']
  #allocation1 [shape = 'u32[144,128]{1,0:T(1,128)}', space=vmem, size = 0x12000, scoped, tag = 'internal scratch']
  %s0 = inlined_call_operand.hbm [shape: bf16[32,128], index: 0, kind: input, shape index: {}]
  %s1 = inlined_call_operand.vmem [shape: bf16[1,4,1024], index: 1, kind: input, shape index: {}]
  %s2 = inlined_call_operand.hbm [shape: bf16[128,256], index: 2, kind: input, shape index: {}]
  %s3 = inlined_call_operand.hbm [shape: f32[4,8,128], index: 3, kind: input, shape index: {}]
  %s4 = inlined_call_operand.hbm [shape: f32[4,8,128], index: 4, kind: input, shape index: {}]
  %s5 = inlined_call_operand.hbm [shape: bf16[128,128], index: 5, kind: input, shape index: {}]
  %s6 = inlined_call_operand.hbm [shape: bf16[128,128], index: 6, kind: input, shape index: {}]
  %s7 = inlined_call_operand.vmem [shape: bf16[8,4], index: 7, kind: input, shape index: {}]
  %s8 = inlined_call_operand.vmem [shape: f32[8,1], index: 8, kind: input, shape index: {}]
  %s9 = inlined_call_operand.hbm [shape: f32[64,128], index: 9, kind: output, shape index: {}]
  %s10 = sld [smem:[#allocation0]]
  $region70: #{tpu_custom_call.1} parent=0
    _
  %s12 = ssub.s32 1, %s10
  %s13 = scalar_select 0, %s12, %s10
  $region1: #{tpu_custom_call.1} parent=0
    #allocation2 [shape = 'u8[8192]{0}', space=vmem, size = 0x2000, scoped, tag = 'input window, operand 0, single buffered']
    #allocation3 [shape = 's32[1]{0}', space=sflag, size = 0x4, scoped, tag = 'scoped memory for tpu_custom_call.1']
    #allocation4 [shape = 's32[1]{0}', space=sflag, size = 0x4, scoped, tag = 'scoped memory for tpu_custom_call.1']
    #allocation5 [shape = 'u8[65536]{0}', space=vmem, size = 0x10000, scoped, tag = 'input window, operand 2, single buffered']
    #allocation6 [shape = 's32[1]{0}', space=sflag, size = 0x4, scoped, tag = 'scoped memory for tpu_custom_call.1']
    #allocation7 [shape = 'u8[16384]{0}', space=vmem, size = 0x4000, scoped, tag = 'input window, operand 3, single buffered']
    #allocation8 [shape = 'u8[16384]{0}', space=vmem, size = 0x4000, scoped, tag = 'input window, operand 4, single buffered']
    #allocation9 [shape = 's32[1]{0}', space=sflag, size = 0x4, scoped, tag = 'scoped memory for tpu_custom_call.1']
    #allocation10 [shape = 'u8[32768]{0}', space=vmem, size = 0x8000, scoped, tag = 'input window, operand 5, single buffered']
    #allocation11 [shape = 'u8[32768]{0}', space=vmem, size = 0x8000, scoped, tag = 'input window, operand 6, single buffered']
    #allocation12 [shape = 's32[1]{0}', space=sflag, size = 0x4, scoped, tag = 'scoped memory for tpu_custom_call.1']
    #allocation13 [shape = 'u8[32768]{0}', space=vmem, size = 0x8000, scoped, tag = 'output window, operand 0, single buffered']
    %14 = vsyncpa [#allocation3], 0
    %15 = vsyncpa [#allocation6], 0
    %16 = vsyncpa [#allocation9], 0
    %17 = vsyncpa [#allocation12], 0
    %18 = vsyncpa [#allocation4], 0
    // Predicated region
    $region2: #{tpu_custom_call.1} parent=1 // pred_check
      _
    $region3: #{tpu_custom_call.1} parent=1 // pred_check_branch
      %20 = sbr.rel (0) target = $region5
    $region4: #{tpu_custom_call.1} parent=1 // pred_region
      %s22 = ssub.s32 256, 256
      %23 = vsyncadd [#allocation3], %s22
      %s24 = sshll.u32 [#allocation2], 4
      %s25 = int_to_ptr.vmem [resolvable:$true] %s24
      %30 = dma.hbm_to_vmem [thread:$0]  %s0, 256, %s25, [#allocation3], 64, 64, 4
    $region5: #{tpu_custom_call.1} parent=1 // pred_fallthru
      _
    // Predicated region
    $region6: #{tpu_custom_call.1} parent=1 // pred_check
      _
    $region7: #{tpu_custom_call.1} parent=1 // pred_check_branch
      %32 = sbr.rel (0) target = $region9
    $region8: #{tpu_custom_call.1} parent=1 // pred_region
      _
    $region9: #{tpu_custom_call.1} parent=1 // pred_fallthru
      _
    // Predicated region
    $region10: #{tpu_custom_call.1} parent=1 // pred_check
      _
    $region11: #{tpu_custom_call.1} parent=1 // pred_check_branch
      %34 = sbr.rel (0) target = $region13
    $region12: #{tpu_custom_call.1} parent=1 // pred_region
      %s36 = ssub.s32 2048, 2048
      %37 = vsyncadd [#allocation6], %s36
      %s38 = sshll.u32 [#allocation5], 4
      %s39 = int_to_ptr.vmem [resolvable:$true] %s38
      %44 = dma.hbm_to_vmem [thread:$0]  %s2, 2048, %s39, [#allocation6], 128, 128, 8
    $region13: #{tpu_custom_call.1} parent=1 // pred_fallthru
      _
    // Predicated region
    $region14: #{tpu_custom_call.1} parent=1 // pred_check
      _
    $region15: #{tpu_custom_call.1} parent=1 // pred_check_branch
      %46 = sbr.rel (0) target = $region17
    $region16: #{tpu_custom_call.1} parent=1 // pred_region
      %s48 = ssub.s32 512, 512
      %49 = vsyncadd [#allocation6], %s48
      %s50 = sshll.u32 [#allocation7], 4
      %s51 = int_to_ptr.vmem [resolvable:$true] %s50
      %56 = dma.hbm_to_vmem [thread:$0]  %s3, 512, %s51, [#allocation6], 128, 128, 8
    $region17: #{tpu_custom_call.1} parent=1 // pred_fallthru
      _
    // Predicated region
    $region18: #{tpu_custom_call.1} parent=1 // pred_check
      _
    $region19: #{tpu_custom_call.1} parent=1 // pred_check_branch
      %58 = sbr.rel (0) target = $region21
    $region20: #{tpu_custom_call.1} parent=1 // pred_region
      %s60 = ssub.s32 512, 512
      %61 = vsyncadd [#allocation9], %s60
      %s62 = sshll.u32 [#allocation8], 4
      %s63 = int_to_ptr.vmem [resolvable:$true] %s62
      %68 = dma.hbm_to_vmem [thread:$0]  %s4, 512, %s63, [#allocation9], 128, 128, 8
    $region21: #{tpu_custom_call.1} parent=1 // pred_fallthru
      _
    // Predicated region
    $region22: #{tpu_custom_call.1} parent=1 // pred_check
      _
    $region23: #{tpu_custom_call.1} parent=1 // pred_check_branch
      %70 = sbr.rel (0) target = $region25
    $region24: #{tpu_custom_call.1} parent=1 // pred_region
      %s72 = ssub.s32 1024, 1024
      %73 = vsyncadd [#allocation9], %s72
      %s74 = sshll.u32 [#allocation10], 4
      %s75 = int_to_ptr.vmem [resolvable:$true] %s74
      %80 = dma.hbm_to_vmem [thread:$0]  %s5, 1024, %s75, [#allocation9], 64, 64, 4
    $region25: #{tpu_custom_call.1} parent=1 // pred_fallthru
      _
    // Predicated region
    $region26: #{tpu_custom_call.1} parent=1 // pred_check
      _
    $region27: #{tpu_custom_call.1} parent=1 // pred_check_branch
      %82 = sbr.rel (0) target = $region29
    $region28: #{tpu_custom_call.1} parent=1 // pred_region
      %s84 = ssub.s32 1024, 1024
      %85 = vsyncadd [#allocation12], %s84
      %s86 = sshll.u32 [#allocation11], 4
      %s87 = int_to_ptr.vmem [resolvable:$true] %s86
      %92 = dma.hbm_to_vmem [thread:$0]  %s6, 1024, %s87, [#allocation12], 64, 64, 4
    $region29: #{tpu_custom_call.1} parent=1 // pred_fallthru
      _
    // Predicated region
    $region30: #{tpu_custom_call.1} parent=1 // pred_check
      _
    $region31: #{tpu_custom_call.1} parent=1 // pred_check_branch
      %94 = sbr.rel (0) target = $region33
    $region32: #{tpu_custom_call.1} parent=1 // pred_region
      _
    $region33: #{tpu_custom_call.1} parent=1 // pred_fallthru
      _
    // Predicated region
    $region34: #{tpu_custom_call.1} parent=1 // pred_check
      _
    $region35: #{tpu_custom_call.1} parent=1 // pred_check_branch
      %96 = sbr.rel (0) target = $region37
    $region36: #{tpu_custom_call.1} parent=1 // pred_region
      _
    $region37: #{tpu_custom_call.1} parent=1 // pred_fallthru
      _
    // Predicated region
    $region38: #{tpu_custom_call.1} parent=1 // pred_check
      _
    $region39: #{tpu_custom_call.1} parent=1 // pred_check_branch
      %98 = sbr.rel (0) target = $region41
    $region40: #{tpu_custom_call.1} parent=1 // pred_region
      %99 = dma.done [#allocation3], 256
    $region41: #{tpu_custom_call.1} parent=1 // pred_fallthru
      _
    // Predicated region
    $region42: #{tpu_custom_call.1} parent=1 // pred_check
      _
    $region43: #{tpu_custom_call.1} parent=1 // pred_check_branch
      %101 = sbr.rel (0) target = $region45
    $region44: #{tpu_custom_call.1} parent=1 // pred_region
      %102 = dma.done [#allocation6], 2048
    $region45: #{tpu_custom_call.1} parent=1 // pred_fallthru
      _
    // Predicated region
    $region46: #{tpu_custom_call.1} parent=1 // pred_check
      _
    $region47: #{tpu_custom_call.1} parent=1 // pred_check_branch
      %104 = sbr.rel (0) target = $region49
    $region48: #{tpu_custom_call.1} parent=1 // pred_region
      %105 = dma.done [#allocation6], 512
    $region49: #{tpu_custom_call.1} parent=1 // pred_fallthru
      _
    // Predicated region
    $region50: #{tpu_custom_call.1} parent=1 // pred_check
      _
    $region51: #{tpu_custom_call.1} parent=1 // pred_check_branch
      %107 = sbr.rel (0) target = $region53
    $region52: #{tpu_custom_call.1} parent=1 // pred_region
      %108 = dma.done [#allocation9], 512
    $region53: #{tpu_custom_call.1} parent=1 // pred_fallthru
      _
    // Predicated region
    $region54: #{tpu_custom_call.1} parent=1 // pred_check
      _
    $region55: #{tpu_custom_call.1} parent=1 // pred_check_branch
      %110 = sbr.rel (0) target = $region57
    $region56: #{tpu_custom_call.1} parent=1 // pred_region
      %111 = dma.done [#allocation9], 1024
    $region57: #{tpu_custom_call.1} parent=1 // pred_fallthru
      _
    // Predicated region
    $region58: #{tpu_custom_call.1} parent=1 // pred_check
      _
    $region59: #{tpu_custom_call.1} parent=1 // pred_check_branch
      %113 = sbr.rel (0) target = $region61
    $region60: #{tpu_custom_call.1} parent=1 // pred_region
      %114 = dma.done [#allocation12], 1024
    $region61: #{tpu_custom_call.1} parent=1 // pred_fallthru
      _
    %v116 = vld [vmem:[#allocation2] sm:$0xf]
    %v117 = vld [vmem:[#allocation2 + $0x4] sm:$0xf]
    %v118 = vld [vmem:[#allocation2 + $0x8] sm:$0xf]
    %v119 = vld [vmem:[#allocation2 + $0xc] sm:$0xf]
    %v120 = vld [vmem:[#allocation5] sm:$0xff]
    %v121 = vld [vmem:[#allocation5 + $0x8] sm:$0xff]
    %v122 = vld [vmem:[#allocation5 + $0x10] sm:$0xff]
    %v123 = vld [vmem:[#allocation5 + $0x18] sm:$0xff]
    %v124 = vld [vmem:[#allocation5 + $0x20] sm:$0xff]
    %v125 = vld [vmem:[#allocation5 + $0x28] sm:$0xff]
    %v126 = vld [vmem:[#allocation5 + $0x30] sm:$0xff]
    %v127 = vld [vmem:[#allocation5 + $0x38] sm:$0xff]
    %v128 = vld [vmem:[#allocation5 + $0x40] sm:$0xff]
    %v129 = vld [vmem:[#allocation5 + $0x48] sm:$0xff]
    %v130 = vld [vmem:[#allocation5 + $0x50] sm:$0xff]
    %v131 = vld [vmem:[#allocation5 + $0x58] sm:$0xff]
    %v132 = vld [vmem:[#allocation5 + $0x60] sm:$0xff]
    %v133 = vld [vmem:[#allocation5 + $0x68] sm:$0xff]
    %v134 = vld [vmem:[#allocation5 + $0x70] sm:$0xff]
    %v135 = vld [vmem:[#allocation5 + $0x78] sm:$0xff]
    %v140 = vunpack.c.l.b16 %v116
    %v141 = vunpack.c.l.b16 %v117
    %v142 = vunpack.c.l.b16 %v118
    %v143 = vunpack.c.l.b16 %v119
    %v144 = vpack.c.b16 %v141, %v140
    %v145 = vpack.c.b16 %v143, %v142
    %v164 = vunpack.c.l.b16 %v120
    %v165 = vunpack.c.h.b16 %v120
    %v166 = vunpack.c.l.b16 %v121
    %v167 = vunpack.c.h.b16 %v121
    %v168 = vunpack.c.l.b16 %v122
    %v169 = vunpack.c.h.b16 %v122
    %v170 = vunpack.c.l.b16 %v123
    %v171 = vunpack.c.h.b16 %v123
    %v172 = vunpack.c.l.b16 %v124
    %v173 = vunpack.c.h.b16 %v124
    %v174 = vunpack.c.l.b16 %v125
    %v175 = vunpack.c.h.b16 %v125
    %v176 = vunpack.c.l.b16 %v126
    %v177 = vunpack.c.h.b16 %v126
    %v178 = vunpack.c.l.b16 %v127
    %v179 = vunpack.c.h.b16 %v127
    %v180 = vunpack.c.l.b16 %v128
    %v181 = vunpack.c.h.b16 %v128
    %v182 = vunpack.c.l.b16 %v129
    %v183 = vunpack.c.h.b16 %v129
    %v184 = vunpack.c.l.b16 %v130
    %v185 = vunpack.c.h.b16 %v130
    %v186 = vunpack.c.l.b16 %v131
    %v187 = vunpack.c.h.b16 %v131
    %v188 = vunpack.c.l.b16 %v132
    %v189 = vunpack.c.h.b16 %v132
    %v190 = vunpack.c.l.b16 %v133
    %v191 = vunpack.c.h.b16 %v133
    %v192 = vunpack.c.l.b16 %v134
    %v193 = vunpack.c.h.b16 %v134
    %v194 = vunpack.c.l.b16 %v135
    %v195 = vunpack.c.h.b16 %v135
    %v196 = vpack.c.b16 %v166, %v164
    %v197 = vpack.c.b16 %v167, %v165
    %v198 = vpack.c.b16 %v170, %v168
    %v199 = vpack.c.b16 %v171, %v169
    %v200 = vpack.c.b16 %v174, %v172
    %v201 = vpack.c.b16 %v175, %v173
    %v202 = vpack.c.b16 %v178, %v176
    %v203 = vpack.c.b16 %v179, %v177
    %v204 = vpack.c.b16 %v182, %v180
    %v205 = vpack.c.b16 %v183, %v181
    %v206 = vpack.c.b16 %v186, %v184
    %v207 = vpack.c.b16 %v187, %v185
    %v208 = vpack.c.b16 %v190, %v188
    %v209 = vpack.c.b16 %v191, %v189
    %v210 = vpack.c.b16 %v194, %v192
    %v211 = vpack.c.b16 %v195, %v193
    %228 = vmatprep.subr.bf16.mxu0 %v197
    %229 = vmatpush1.bf16.msra.mxu0 %v196
    %230 = vmatprep.subr.bf16.mxu0 %v199
    %231 = vmatpush1.bf16.msra.mxu0 %v198
    %232 = vmatprep.subr.bf16.mxu0 %v201
    %233 = vmatpush1.bf16.msra.mxu0 %v200
    %234 = vmatprep.subr.bf16.mxu0 %v203
    %235 = vmatpush1.bf16.msra.mxu0 %v202
    %236 = vmatprep.subr.bf16.mxu0 %v205
    %237 = vmatpush1.bf16.msra.mxu0 %v204
    %238 = vmatprep.subr.bf16.mxu0 %v207
    %239 = vmatpush1.bf16.msra.mxu0 %v206
    %240 = vmatprep.subr.bf16.mxu0 %v209
    %241 = vmatpush1.bf16.msra.mxu0 %v208
    %242 = vmatprep.subr.bf16.mxu0 %v211
    %243 = vmatpush1.bf16.msra.mxu0 %v210
    %244 = vmatprep.subr.bf16.mxu0 0
    %245 = vmatpush1.bf16.msra.mxu0 0
    %246 = vmatprep.subr.bf16.mxu0 0
    %247 = vmatpush1.bf16.msra.mxu0 0
    %248 = vmatprep.subr.bf16.mxu0 0
    %249 = vmatpush1.bf16.msra.mxu0 0
    %250 = vmatprep.subr.bf16.mxu0 0
    %251 = vmatpush1.bf16.msra.mxu0 0
    %252 = vmatprep.subr.bf16.mxu0 0
    %253 = vmatpush1.bf16.msra.mxu0 0
    %254 = vmatprep.subr.bf16.mxu0 0
    %255 = vmatpush1.bf16.msra.mxu0 0
    %256 = vmatprep.subr.bf16.mxu0 0
    %257 = vmatpush1.bf16.msra.mxu0 0
    %258 = vmatprep.subr.bf16.mxu0 0
    %259 = vmatpush1.bf16.msra.mxu0 0
    %260 = vmatprep.mubr.bf16.mxu0 0
    %261 = vmatmul.mubr.bf16.gmra.mrb[0].mxu0 %v144
    %v262 = vpop.f32.mrb[0].mxu0
    %v263 = vadd.f32 0.0, %v262
    %v264 = vpop.f32.mrb[0].mxu0
    %v265 = vadd.f32 0.0, %v264
    %v266 = vpop.f32.mrb[0].mxu0
    %v267 = vadd.f32 0.0, %v266
    %v268 = vpop.f32.mrb[0].mxu0
    %v269 = vadd.f32 0.0, %v268
    %270 = vmatprep.mubr.bf16.mxu0 0
    %271 = vmatmul.mubr.bf16.gmra.mrb[0].mxu0 %v145
    %v272 = vpop.f32.mrb[0].mxu0
    %v273 = vadd.f32 0.0, %v272
    %v274 = vpop.f32.mrb[0].mxu0
    %v275 = vadd.f32 0.0, %v274
    %v276 = vpop.f32.mrb[0].mxu0
    %v277 = vadd.f32 0.0, %v276
    %v278 = vpop.f32.mrb[0].mxu0
    %v279 = vadd.f32 0.0, %v278
    %280 = vdwg.mxu0
    %v282 = vcombine.high %v263, %v263
    %v284 = vunpack.c.l.s4 1966171168
    %v285 = vunpack.c.0.s8 %v284
    %v286 = vlaneseq
    %v287 = vshrl.u32 %v286, 7
    %v288 = vsub.s32 %v285, %v287
    %v289 = vrot.slane %v263, %v288
    %v291 = vunpack.c.l.s4 1966171168
    %v292 = vunpack.c.0.s8 %v291
    %v293 = vlaneseq
    %v294 = vshrl.u32 %v293, 7
    %v295 = vsub.s32 %v292, %v294
    %v296 = vrot.slane %v282, %v295
    %v297 = vcombine.high %v289, %v289
    %v298 = vcombine.high %v296, %v296
    %v300 = vunpack.c.l.s4 1966171168
    %v301 = vunpack.c.0.s8 %v300
    %v302 = vlaneseq
    %v303 = vshrl.u32 %v302, 7
    %v304 = vsub.s32 %v301, %v303
    %v305 = vrot.slane %v289, %v304
    %v307 = vunpack.c.l.s4 1966171168
    %v308 = vunpack.c.0.s8 %v307
    %v309 = vlaneseq
    %v310 = vshrl.u32 %v309, 7
    %v311 = vsub.s32 %v308, %v310
    %v312 = vrot.slane %v296, %v311
    %v314 = vunpack.c.l.s4 1966171168
    %v315 = vunpack.c.0.s8 %v314
    %v316 = vlaneseq
    %v317 = vshrl.u32 %v316, 7
    %v318 = vsub.s32 %v315, %v317
    %v319 = vrot.slane %v297, %v318
    %v321 = vunpack.c.l.s4 1966171168
    %v322 = vunpack.c.0.s8 %v321
    %v323 = vlaneseq
    %v324 = vshrl.u32 %v323, 7
    %v325 = vsub.s32 %v322, %v324
    %v326 = vrot.slane %v298, %v325
    %v327 = vcombine.high %v305, %v305
    %v328 = vcombine.high %v312, %v312
    %v329 = vcombine.high %v319, %v319
    %v330 = vcombine.high %v326, %v326
    %v332 = vcombine.high %v265, %v265
    %v334 = vunpack.c.l.s4 1966171168
    %v335 = vunpack.c.0.s8 %v334
    %v336 = vlaneseq
    %v337 = vshrl.u32 %v336, 7
    %v338 = vsub.s32 %v335, %v337
    %v339 = vrot.slane %v265, %v338
    %v341 = vunpack.c.l.s4 1966171168
    %v342 = vunpack.c.0.s8 %v341
    %v343 = vlaneseq
    %v344 = vshrl.u32 %v343, 7
    %v345 = vsub.s32 %v342, %v344
    %v346 = vrot.slane %v332, %v345
    %v347 = vcombine.high %v339, %v339
    %v348 = vcombine.high %v346, %v346
    %v350 = vunpack.c.l.s4 1966171168
    %v351 = vunpack.c.0.s8 %v350
    %v352 = vlaneseq
    %v353 = vshrl.u32 %v352, 7
    %v354 = vsub.s32 %v351, %v353
    %v355 = vrot.slane %v339, %v354
    %v357 = vunpack.c.l.s4 1966171168
    %v358 = vunpack.c.0.s8 %v357
    %v359 = vlaneseq
    %v360 = vshrl.u32 %v359, 7
    %v361 = vsub.s32 %v358, %v360
    %v362 = vrot.slane %v346, %v361
    %v364 = vunpack.c.l.s4 1966171168
    %v365 = vunpack.c.0.s8 %v364
    %v366 = vlaneseq
    %v367 = vshrl.u32 %v366, 7
    %v368 = vsub.s32 %v365, %v367
    %v369 = vrot.slane %v347, %v368
    %v371 = vunpack.c.l.s4 1966171168
    %v372 = vunpack.c.0.s8 %v371
    %v373 = vlaneseq
    %v374 = vshrl.u32 %v373, 7
    %v375 = vsub.s32 %v372, %v374
    %v376 = vrot.slane %v348, %v375
    %v377 = vcombine.high %v355, %v355
    %v378 = vcombine.high %v362, %v362
    %v379 = vcombine.high %v369, %v369
    %v380 = vcombine.high %v376, %v376
    %v381 = vld [vmem:[#allocation7] sm:$0xff]
    %v382 = vld [vmem:[#allocation8] sm:$0xff]
    %v383 = vlaneseq
    %v384 = vshrl.u32 %v383, 7
    %v385 = vsub.s32 0, %v384
    %v386 = vrot.slane %v305, %v385
    %v387 = vlaneseq
    %v388 = vshrl.u32 %v387, 7
    %v389 = vsub.s32 0, %v388
    %v390 = vrot.slane %v319, %v389
    %v391 = vlaneseq
    %v392 = vshrl.u32 %v391, 7
    %v393 = vsub.s32 0, %v392
    %v394 = vrot.slane %v327, %v393
    %v395 = vlaneseq
    %v396 = vshrl.u32 %v395, 7
    %v397 = vsub.s32 0, %v396
    %v398 = vrot.slane %v329, %v397
    %v399 = vlaneseq
    %v400 = vshrl.u32 %v399, 7
    %v401 = vsub.s32 0, %v400
    %v402 = vrot.slane %v312, %v401
    %v403 = vlaneseq
    %v404 = vshrl.u32 %v403, 7
    %v405 = vsub.s32 0, %v404
    %v406 = vrot.slane %v326, %v405
    %v407 = vlaneseq
    %v408 = vshrl.u32 %v407, 7
    %v409 = vsub.s32 0, %v408
    %v410 = vrot.slane %v328, %v409
    %v411 = vlaneseq
    %v412 = vshrl.u32 %v411, 7
    %v413 = vsub.s32 0, %v412
    %v414 = vrot.slane %v330, %v413
    %v423 = vmul.f32 %v386, %v381
    %v424 = vmul.f32 %v390, %v381
    %v425 = vmul.f32 %v394, %v381
    %v426 = vmul.f32 %v398, %v381
    %v427 = vmul.f32 %v402, %v381
    %v428 = vmul.f32 %v406, %v381
    %v429 = vmul.f32 %v410, %v381
    %v430 = vmul.f32 %v414, %v381
    %v431 = vadd.f32 %v423, 0.0
    %v432 = vadd.f32 %v424, 0.0
    %v433 = vadd.f32 %v425, 0.0
    %v434 = vadd.f32 %v426, 0.0
    %v435 = vadd.f32 %v427, 0.0
    %v436 = vadd.f32 %v428, 0.0
    %v437 = vadd.f32 %v429, 0.0
    %v438 = vadd.f32 %v430, 0.0
    %v439 = vlaneseq
    %v440 = vshrl.u32 %v439, 7
    %v441 = vsub.s32 0, %v440
    %v442 = vrot.slane %v355, %v441
    %v443 = vlaneseq
    %v444 = vshrl.u32 %v443, 7
    %v445 = vsub.s32 0, %v444
    %v446 = vrot.slane %v369, %v445
    %v447 = vlaneseq
    %v448 = vshrl.u32 %v447, 7
    %v449 = vsub.s32 0, %v448
    %v450 = vrot.slane %v377, %v449
    %v451 = vlaneseq
    %v452 = vshrl.u32 %v451, 7
    %v453 = vsub.s32 0, %v452
    %v454 = vrot.slane %v379, %v453
    %v455 = vlaneseq
    %v456 = vshrl.u32 %v455, 7
    %v457 = vsub.s32 0, %v456
    %v458 = vrot.slane %v362, %v457
    %v459 = vlaneseq
    %v460 = vshrl.u32 %v459, 7
    %v461 = vsub.s32 0, %v460
    %v462 = vrot.slane %v376, %v461
    %v463 = vlaneseq
    %v464 = vshrl.u32 %v463, 7
    %v465 = vsub.s32 0, %v464
    %v466 = vrot.slane %v378, %v465
    %v467 = vlaneseq
    %v468 = vshrl.u32 %v467, 7
    %v469 = vsub.s32 0, %v468
    %v470 = vrot.slane %v380, %v469
    %v479 = vmul.f32 %v442, %v382
    %v480 = vmul.f32 %v446, %v382
    %v481 = vmul.f32 %v450, %v382
    %v482 = vmul.f32 %v454, %v382
    %v483 = vmul.f32 %v458, %v382
    %v484 = vmul.f32 %v462, %v382
    %v485 = vmul.f32 %v466, %v382
    %v486 = vmul.f32 %v470, %v382
    %v487 = vsub.f32 %v431, %v479
    %v488 = vsub.f32 %v432, %v480
    %v489 = vsub.f32 %v433, %v481
    %v490 = vsub.f32 %v434, %v482
    %v491 = vsub.f32 %v435, %v483
    %v492 = vsub.f32 %v436, %v484
    %v493 = vsub.f32 %v437, %v485
    %v494 = vsub.f32 %v438, %v486
    %v495 = vmul.f32 %v386, %v382
    %v496 = vmul.f32 %v390, %v382
    %v497 = vmul.f32 %v394, %v382
    %v498 = vmul.f32 %v398, %v382
    %v499 = vmul.f32 %v402, %v382
    %v500 = vmul.f32 %v406, %v382
    %v501 = vmul.f32 %v410, %v382
    %v502 = vmul.f32 %v414, %v382
    %v503 = vadd.f32 %v495, 0.0
    %v504 = vadd.f32 %v496, 0.0
    %v505 = vadd.f32 %v497, 0.0
    %v506 = vadd.f32 %v498, 0.0
    %v507 = vadd.f32 %v499, 0.0
    %v508 = vadd.f32 %v500, 0.0
    %v509 = vadd.f32 %v501, 0.0
    %v510 = vadd.f32 %v502, 0.0
    %v511 = vmul.f32 %v442, %v381
    %v512 = vmul.f32 %v446, %v381
    %v513 = vmul.f32 %v450, %v381
    %v514 = vmul.f32 %v454, %v381
    %v515 = vmul.f32 %v458, %v381
    %v516 = vmul.f32 %v462, %v381
    %v517 = vmul.f32 %v466, %v381
    %v518 = vmul.f32 %v470, %v381
    %v519 = vadd.f32 %v503, %v511
    %v520 = vadd.f32 %v504, %v512
    %v521 = vadd.f32 %v505, %v513
    %v522 = vadd.f32 %v506, %v514
    %v523 = vadd.f32 %v507, %v515
    %v524 = vadd.f32 %v508, %v516
    %v525 = vadd.f32 %v509, %v517
    %v526 = vadd.f32 %v510, %v518
    %v528 = vcombine.high %v267, %v267
    %v530 = vunpack.c.l.s4 1966171168
    %v531 = vunpack.c.0.s8 %v530
    %v532 = vlaneseq
    %v533 = vshrl.u32 %v532, 7
    %v534 = vsub.s32 %v531, %v533
    %v535 = vrot.slane %v267, %v534
    %v537 = vunpack.c.l.s4 1966171168
    %v538 = vunpack.c.0.s8 %v537
    %v539 = vlaneseq
    %v540 = vshrl.u32 %v539, 7
    %v541 = vsub.s32 %v538, %v540
    %v542 = vrot.slane %v528, %v541
    %v543 = vcombine.high %v535, %v535
    %v544 = vcombine.high %v542, %v542
    %v546 = vunpack.c.l.s4 1966171168
    %v547 = vunpack.c.0.s8 %v546
    %v548 = vlaneseq
    %v549 = vshrl.u32 %v548, 7
    %v550 = vsub.s32 %v547, %v549
    %v551 = vrot.slane %v535, %v550
    %v553 = vunpack.c.l.s4 1966171168
    %v554 = vunpack.c.0.s8 %v553
    %v555 = vlaneseq
    %v556 = vshrl.u32 %v555, 7
    %v557 = vsub.s32 %v554, %v556
    %v558 = vrot.slane %v542, %v557
    %v560 = vunpack.c.l.s4 1966171168
    %v561 = vunpack.c.0.s8 %v560
    %v562 = vlaneseq
    %v563 = vshrl.u32 %v562, 7
    %v564 = vsub.s32 %v561, %v563
    %v565 = vrot.slane %v543, %v564
    %v567 = vunpack.c.l.s4 1966171168
    %v568 = vunpack.c.0.s8 %v567
    %v569 = vlaneseq
    %v570 = vshrl.u32 %v569, 7
    %v571 = vsub.s32 %v568, %v570
    %v572 = vrot.slane %v544, %v571
    %v573 = vcombine.high %v551, %v551
    %v574 = vcombine.high %v558, %v558
    %v575 = vcombine.high %v565, %v565
    %v576 = vcombine.high %v572, %v572
    %v578 = vcombine.high %v269, %v269
    %v580 = vunpack.c.l.s4 1966171168
    %v581 = vunpack.c.0.s8 %v580
    %v582 = vlaneseq
    %v583 = vshrl.u32 %v582, 7
    %v584 = vsub.s32 %v581, %v583
    %v585 = vrot.slane %v269, %v584
    %v587 = vunpack.c.l.s4 1966171168
    %v588 = vunpack.c.0.s8 %v587
    %v589 = vlaneseq
    %v590 = vshrl.u32 %v589, 7
    %v591 = vsub.s32 %v588, %v590
    %v592 = vrot.slane %v578, %v591
    %v593 = vcombine.high %v585, %v585
    %v594 = vcombine.high %v592, %v592
    %v596 = vunpack.c.l.s4 1966171168
    %v597 = vunpack.c.0.s8 %v596
    %v598 = vlaneseq
    %v599 = vshrl.u32 %v598, 7
    %v600 = vsub.s32 %v597, %v599
    %v601 = vrot.slane %v585, %v600
    %v603 = vunpack.c.l.s4 1966171168
    %v604 = vunpack.c.0.s8 %v603
    %v605 = vlaneseq
    %v606 = vshrl.u32 %v605, 7
    %v607 = vsub.s32 %v604, %v606
    %v608 = vrot.slane %v592, %v607
    %v610 = vunpack.c.l.s4 1966171168
    %v611 = vunpack.c.0.s8 %v610
    %v612 = vlaneseq
    %v613 = vshrl.u32 %v612, 7
    %v614 = vsub.s32 %v611, %v613
    %v615 = vrot.slane %v593, %v614
    %v617 = vunpack.c.l.s4 1966171168
    %v618 = vunpack.c.0.s8 %v617
    %v619 = vlaneseq
    %v620 = vshrl.u32 %v619, 7
    %v621 = vsub.s32 %v618, %v620
    %v622 = vrot.slane %v594, %v621
    %v623 = vcombine.high %v601, %v601
    %v624 = vcombine.high %v608, %v608
    %v625 = vcombine.high %v615, %v615
    %v626 = vcombine.high %v622, %v622
    %s627 = scalar_lea.vmem [#allocation7], 8
    %v628 = vld [vmem:[%s627] sm:$0xff]
    %s629 = scalar_lea.vmem [#allocation8], 8
    %v630 = vld [vmem:[%s629] sm:$0xff]
    %v631 = vlaneseq
    %v632 = vshrl.u32 %v631, 7
    %v633 = vsub.s32 0, %v632
    %v634 = vrot.slane %v551, %v633
    %v635 = vlaneseq
    %v636 = vshrl.u32 %v635, 7
    %v637 = vsub.s32 0, %v636
    %v638 = vrot.slane %v565, %v637
    %v639 = vlaneseq
    %v640 = vshrl.u32 %v639, 7
    %v641 = vsub.s32 0, %v640
    %v642 = vrot.slane %v573, %v641
    %v643 = vlaneseq
    %v644 = vshrl.u32 %v643, 7
    %v645 = vsub.s32 0, %v644
    %v646 = vrot.slane %v575, %v645
    %v647 = vlaneseq
    %v648 = vshrl.u32 %v647, 7
    %v649 = vsub.s32 0, %v648
    %v650 = vrot.slane %v558, %v649
    %v651 = vlaneseq
    %v652 = vshrl.u32 %v651, 7
    %v653 = vsub.s32 0, %v652
    %v654 = vrot.slane %v572, %v653
    %v655 = vlaneseq
    %v656 = vshrl.u32 %v655, 7
    %v657 = vsub.s32 0, %v656
    %v658 = vrot.slane %v574, %v657
    %v659 = vlaneseq
    %v660 = vshrl.u32 %v659, 7
    %v661 = vsub.s32 0, %v660
    %v662 = vrot.slane %v576, %v661
    %v671 = vmul.f32 %v634, %v628
    %v672 = vmul.f32 %v638, %v628
    %v673 = vmul.f32 %v642, %v628
    %v674 = vmul.f32 %v646, %v628
    %v675 = vmul.f32 %v650, %v628
    %v676 = vmul.f32 %v654, %v628
    %v677 = vmul.f32 %v658, %v628
    %v678 = vmul.f32 %v662, %v628
    %v679 = vadd.f32 %v487, %v671
    %v680 = vadd.f32 %v488, %v672
    %v681 = vadd.f32 %v489, %v673
    %v682 = vadd.f32 %v490, %v674
    %v683 = vadd.f32 %v491, %v675
    %v684 = vadd.f32 %v492, %v676
    %v685 = vadd.f32 %v493, %v677
    %v686 = vadd.f32 %v494, %v678
    %v687 = vlaneseq
    %v688 = vshrl.u32 %v687, 7
    %v689 = vsub.s32 0, %v688
    %v690 = vrot.slane %v601, %v689
    %v691 = vlaneseq
    %v692 = vshrl.u32 %v691, 7
    %v693 = vsub.s32 0, %v692
    %v694 = vrot.slane %v615, %v693
    %v695 = vlaneseq
    %v696 = vshrl.u32 %v695, 7
    %v697 = vsub.s32 0, %v696
    %v698 = vrot.slane %v623, %v697
    %v699 = vlaneseq
    %v700 = vshrl.u32 %v699, 7
    %v701 = vsub.s32 0, %v700
    %v702 = vrot.slane %v625, %v701
    %v703 = vlaneseq
    %v704 = vshrl.u32 %v703, 7
    %v705 = vsub.s32 0, %v704
    %v706 = vrot.slane %v608, %v705
    %v707 = vlaneseq
    %v708 = vshrl.u32 %v707, 7
    %v709 = vsub.s32 0, %v708
    %v710 = vrot.slane %v622, %v709
    %v711 = vlaneseq
    %v712 = vshrl.u32 %v711, 7
    %v713 = vsub.s32 0, %v712
    %v714 = vrot.slane %v624, %v713
    %v715 = vlaneseq
    %v716 = vshrl.u32 %v715, 7
    %v717 = vsub.s32 0, %v716
    %v718 = vrot.slane %v626, %v717
    %v727 = vmul.f32 %v690, %v630
    %v728 = vmul.f32 %v694, %v630
    %v729 = vmul.f32 %v698, %v630
    %v730 = vmul.f32 %v702, %v630
    %v731 = vmul.f32 %v706, %v630
    %v732 = vmul.f32 %v710, %v630
    %v733 = vmul.f32 %v714, %v630
    %v734 = vmul.f32 %v718, %v630
    %v735 = vsub.f32 %v679, %v727
    %v736 = vsub.f32 %v680, %v728
    %v737 = vsub.f32 %v681, %v729
    %v738 = vsub.f32 %v682, %v730
    %v739 = vsub.f32 %v683, %v731
    %v740 = vsub.f32 %v684, %v732
    %v741 = vsub.f32 %v685, %v733
    %v742 = vsub.f32 %v686, %v734
    %v743 = vmul.f32 %v634, %v630
    %v744 = vmul.f32 %v638, %v630
    %v745 = vmul.f32 %v642, %v630
    %v746 = vmul.f32 %v646, %v630
    %v747 = vmul.f32 %v650, %v630
    %v748 = vmul.f32 %v654, %v630
    %v749 = vmul.f32 %v658, %v630
    %v750 = vmul.f32 %v662, %v630
    %v751 = vadd.f32 %v519, %v743
    %v752 = vadd.f32 %v520, %v744
    %v753 = vadd.f32 %v521, %v745
    %v754 = vadd.f32 %v522, %v746
    %v755 = vadd.f32 %v523, %v747
    %v756 = vadd.f32 %v524, %v748
    %v757 = vadd.f32 %v525, %v749
    %v758 = vadd.f32 %v526, %v750
    %v759 = vmul.f32 %v690, %v628
    %v760 = vmul.f32 %v694, %v628
    %v761 = vmul.f32 %v698, %v628
    %v762 = vmul.f32 %v702, %v628
    %v763 = vmul.f32 %v706, %v628
    %v764 = vmul.f32 %v710, %v628
    %v765 = vmul.f32 %v714, %v628
    %v766 = vmul.f32 %v718, %v628
    %v767 = vadd.f32 %v751, %v759
    %v768 = vadd.f32 %v752, %v760
    %v769 = vadd.f32 %v753, %v761
    %v770 = vadd.f32 %v754, %v762
    %v771 = vadd.f32 %v755, %v763
    %v772 = vadd.f32 %v756, %v764
    %v773 = vadd.f32 %v757, %v765
    %v774 = vadd.f32 %v758, %v766
    %v776 = vcombine.high %v273, %v273
    %v778 = vunpack.c.l.s4 1966171168
    %v779 = vunpack.c.0.s8 %v778
    %v780 = vlaneseq
    %v781 = vshrl.u32 %v780, 7
    %v782 = vsub.s32 %v779, %v781
    %v783 = vrot.slane %v273, %v782
    %v785 = vunpack.c.l.s4 1966171168
    %v786 = vunpack.c.0.s8 %v785
    %v787 = vlaneseq
    %v788 = vshrl.u32 %v787, 7
    %v789 = vsub.s32 %v786, %v788
    %v790 = vrot.slane %v776, %v789
    %v791 = vcombine.high %v783, %v783
    %v792 = vcombine.high %v790, %v790
    %v794 = vunpack.c.l.s4 1966171168
    %v795 = vunpack.c.0.s8 %v794
    %v796 = vlaneseq
    %v797 = vshrl.u32 %v796, 7
    %v798 = vsub.s32 %v795, %v797
    %v799 = vrot.slane %v783, %v798
    %v801 = vunpack.c.l.s4 1966171168
    %v802 = vunpack.c.0.s8 %v801
    %v803 = vlaneseq
    %v804 = vshrl.u32 %v803, 7
    %v805 = vsub.s32 %v802, %v804
    %v806 = vrot.slane %v790, %v805
    %v808 = vunpack.c.l.s4 1966171168
    %v809 = vunpack.c.0.s8 %v808
    %v810 = vlaneseq
    %v811 = vshrl.u32 %v810, 7
    %v812 = vsub.s32 %v809, %v811
    %v813 = vrot.slane %v791, %v812
    %v815 = vunpack.c.l.s4 1966171168
    %v816 = vunpack.c.0.s8 %v815
    %v817 = vlaneseq
    %v818 = vshrl.u32 %v817, 7
    %v819 = vsub.s32 %v816, %v818
    %v820 = vrot.slane %v792, %v819
    %v821 = vcombine.high %v799, %v799
    %v822 = vcombine.high %v806, %v806
    %v823 = vcombine.high %v813, %v813
    %v824 = vcombine.high %v820, %v820
    %v826 = vcombine.high %v275, %v275
    %v828 = vunpack.c.l.s4 1966171168
    %v829 = vunpack.c.0.s8 %v828
    %v830 = vlaneseq
    %v831 = vshrl.u32 %v830, 7
    %v832 = vsub.s32 %v829, %v831
    %v833 = vrot.slane %v275, %v832
    %v835 = vunpack.c.l.s4 1966171168
    %v836 = vunpack.c.0.s8 %v835
    %v837 = vlaneseq
    %v838 = vshrl.u32 %v837, 7
    %v839 = vsub.s32 %v836, %v838
    %v840 = vrot.slane %v826, %v839
    %v841 = vcombine.high %v833, %v833
    %v842 = vcombine.high %v840, %v840
    %v844 = vunpack.c.l.s4 1966171168
    %v845 = vunpack.c.0.s8 %v844
    %v846 = vlaneseq
    %v847 = vshrl.u32 %v846, 7
    %v848 = vsub.s32 %v845, %v847
    %v849 = vrot.slane %v833, %v848
    %v851 = vunpack.c.l.s4 1966171168
    %v852 = vunpack.c.0.s8 %v851
    %v853 = vlaneseq
    %v854 = vshrl.u32 %v853, 7
    %v855 = vsub.s32 %v852, %v854
    %v856 = vrot.slane %v840, %v855
    %v858 = vunpack.c.l.s4 1966171168
    %v859 = vunpack.c.0.s8 %v858
    %v860 = vlaneseq
    %v861 = vshrl.u32 %v860, 7
    %v862 = vsub.s32 %v859, %v861
    %v863 = vrot.slane %v841, %v862
    %v865 = vunpack.c.l.s4 1966171168
    %v866 = vunpack.c.0.s8 %v865
    %v867 = vlaneseq
    %v868 = vshrl.u32 %v867, 7
    %v869 = vsub.s32 %v866, %v868
    %v870 = vrot.slane %v842, %v869
    %v871 = vcombine.high %v849, %v849
    %v872 = vcombine.high %v856, %v856
    %v873 = vcombine.high %v863, %v863
    %v874 = vcombine.high %v870, %v870
    %s875 = scalar_lea.vmem [#allocation7], 16
    %v876 = vld [vmem:[%s875] sm:$0xff]
    %s877 = scalar_lea.vmem [#allocation8], 16
    %v878 = vld [vmem:[%s877] sm:$0xff]
    %v879 = vlaneseq
    %v880 = vshrl.u32 %v879, 7
    %v881 = vsub.s32 0, %v880
    %v882 = vrot.slane %v799, %v881
    %v883 = vlaneseq
    %v884 = vshrl.u32 %v883, 7
    %v885 = vsub.s32 0, %v884
    %v886 = vrot.slane %v813, %v885
    %v887 = vlaneseq
    %v888 = vshrl.u32 %v887, 7
    %v889 = vsub.s32 0, %v888
    %v890 = vrot.slane %v821, %v889
    %v891 = vlaneseq
    %v892 = vshrl.u32 %v891, 7
    %v893 = vsub.s32 0, %v892
    %v894 = vrot.slane %v823, %v893
    %v895 = vlaneseq
    %v896 = vshrl.u32 %v895, 7
    %v897 = vsub.s32 0, %v896
    %v898 = vrot.slane %v806, %v897
    %v899 = vlaneseq
    %v900 = vshrl.u32 %v899, 7
    %v901 = vsub.s32 0, %v900
    %v902 = vrot.slane %v820, %v901
    %v903 = vlaneseq
    %v904 = vshrl.u32 %v903, 7
    %v905 = vsub.s32 0, %v904
    %v906 = vrot.slane %v822, %v905
    %v907 = vlaneseq
    %v908 = vshrl.u32 %v907, 7
    %v909 = vsub.s32 0, %v908
    %v910 = vrot.slane %v824, %v909
    %v919 = vmul.f32 %v882, %v876
    %v920 = vmul.f32 %v886, %v876
    %v921 = vmul.f32 %v890, %v876
    %v922 = vmul.f32 %v894, %v876
    %v923 = vmul.f32 %v898, %v876
    %v924 = vmul.f32 %v902, %v876
    %v925 = vmul.f32 %v906, %v876
    %v926 = vmul.f32 %v910, %v876
    %v927 = vadd.f32 %v735, %v919
    %v928 = vadd.f32 %v736, %v920
    %v929 = vadd.f32 %v737, %v921
    %v930 = vadd.f32 %v738, %v922
    %v931 = vadd.f32 %v739, %v923
    %v932 = vadd.f32 %v740, %v924
    %v933 = vadd.f32 %v741, %v925
    %v934 = vadd.f32 %v742, %v926
    %v935 = vlaneseq
    %v936 = vshrl.u32 %v935, 7
    %v937 = vsub.s32 0, %v936
    %v938 = vrot.slane %v849, %v937
    %v939 = vlaneseq
    %v940 = vshrl.u32 %v939, 7
    %v941 = vsub.s32 0, %v940
    %v942 = vrot.slane %v863, %v941
    %v943 = vlaneseq
    %v944 = vshrl.u32 %v943, 7
    %v945 = vsub.s32 0, %v944
    %v946 = vrot.slane %v871, %v945
    %v947 = vlaneseq
    %v948 = vshrl.u32 %v947, 7
    %v949 = vsub.s32 0, %v948
    %v950 = vrot.slane %v873, %v949
    %v951 = vlaneseq
    %v952 = vshrl.u32 %v951, 7
    %v953 = vsub.s32 0, %v952
    %v954 = vrot.slane %v856, %v953
    %v955 = vlaneseq
    %v956 = vshrl.u32 %v955, 7
    %v957 = vsub.s32 0, %v956
    %v958 = vrot.slane %v870, %v957
    %v959 = vlaneseq
    %v960 = vshrl.u32 %v959, 7
    %v961 = vsub.s32 0, %v960
    %v962 = vrot.slane %v872, %v961
    %v963 = vlaneseq
    %v964 = vshrl.u32 %v963, 7
    %v965 = vsub.s32 0, %v964
    %v966 = vrot.slane %v874, %v965
    %v975 = vmul.f32 %v938, %v878
    %v976 = vmul.f32 %v942, %v878
    %v977 = vmul.f32 %v946, %v878
    %v978 = vmul.f32 %v950, %v878
    %v979 = vmul.f32 %v954, %v878
    %v980 = vmul.f32 %v958, %v878
    %v981 = vmul.f32 %v962, %v878
    %v982 = vmul.f32 %v966, %v878
    %v983 = vsub.f32 %v927, %v975
    %v984 = vsub.f32 %v928, %v976
    %v985 = vsub.f32 %v929, %v977
    %v986 = vsub.f32 %v930, %v978
    %v987 = vsub.f32 %v931, %v979
    %v988 = vsub.f32 %v932, %v980
    %v989 = vsub.f32 %v933, %v981
    %v990 = vsub.f32 %v934, %v982
    %v991 = vmul.f32 %v882, %v878
    %v992 = vmul.f32 %v886, %v878
    %v993 = vmul.f32 %v890, %v878
    %v994 = vmul.f32 %v894, %v878
    %v995 = vmul.f32 %v898, %v878
    %v996 = vmul.f32 %v902, %v878
    %v997 = vmul.f32 %v906, %v878
    %v998 = vmul.f32 %v910, %v878
    %v999 = vadd.f32 %v767, %v991
    %v1000 = vadd.f32 %v768, %v992
    %v1001 = vadd.f32 %v769, %v993
    %v1002 = vadd.f32 %v770, %v994
    %v1003 = vadd.f32 %v771, %v995
    %v1004 = vadd.f32 %v772, %v996
    %v1005 = vadd.f32 %v773, %v997
    %v1006 = vadd.f32 %v774, %v998
    %v1007 = vmul.f32 %v938, %v876
    %v1008 = vmul.f32 %v942, %v876
    %v1009 = vmul.f32 %v946, %v876
    %v1010 = vmul.f32 %v950, %v876
    %v1011 = vmul.f32 %v954, %v876
    %v1012 = vmul.f32 %v958, %v876
    %v1013 = vmul.f32 %v962, %v876
    %v1014 = vmul.f32 %v966, %v876
    %v1015 = vadd.f32 %v999, %v1007
    %v1016 = vadd.f32 %v1000, %v1008
    %v1017 = vadd.f32 %v1001, %v1009
    %v1018 = vadd.f32 %v1002, %v1010
    %v1019 = vadd.f32 %v1003, %v1011
    %v1020 = vadd.f32 %v1004, %v1012
    %v1021 = vadd.f32 %v1005, %v1013
    %v1022 = vadd.f32 %v1006, %v1014
    %v1024 = vcombine.high %v277, %v277
    %v1026 = vunpack.c.l.s4 1966171168
    %v1027 = vunpack.c.0.s8 %v1026
    %v1028 = vlaneseq
    %v1029 = vshrl.u32 %v1028, 7
    %v1030 = vsub.s32 %v1027, %v1029
    %v1031 = vrot.slane %v277, %v1030
    %v1033 = vunpack.c.l.s4 1966171168
    %v1034 = vunpack.c.0.s8 %v1033
    %v1035 = vlaneseq
    %v1036 = vshrl.u32 %v1035, 7
    %v1037 = vsub.s32 %v1034, %v1036
    %v1038 = vrot.slane %v1024, %v1037
    %v1039 = vcombine.high %v1031, %v1031
    %v1040 = vcombine.high %v1038, %v1038
    %v1042 = vunpack.c.l.s4 1966171168
    %v1043 = vunpack.c.0.s8 %v1042
    %v1044 = vlaneseq
    %v1045 = vshrl.u32 %v1044, 7
    %v1046 = vsub.s32 %v1043, %v1045
    %v1047 = vrot.slane %v1031, %v1046
    %v1049 = vunpack.c.l.s4 1966171168
    %v1050 = vunpack.c.0.s8 %v1049
    %v1051 = vlaneseq
    %v1052 = vshrl.u32 %v1051, 7
    %v1053 = vsub.s32 %v1050, %v1052
    %v1054 = vrot.slane %v1038, %v1053
    %v1056 = vunpack.c.l.s4 1966171168
    %v1057 = vunpack.c.0.s8 %v1056
    %v1058 = vlaneseq
    %v1059 = vshrl.u32 %v1058, 7
    %v1060 = vsub.s32 %v1057, %v1059
    %v1061 = vrot.slane %v1039, %v1060
    %v1063 = vunpack.c.l.s4 1966171168
    %v1064 = vunpack.c.0.s8 %v1063
    %v1065 = vlaneseq
    %v1066 = vshrl.u32 %v1065, 7
    %v1067 = vsub.s32 %v1064, %v1066
    %v1068 = vrot.slane %v1040, %v1067
    %v1069 = vcombine.high %v1047, %v1047
    %v1070 = vcombine.high %v1054, %v1054
    %v1071 = vcombine.high %v1061, %v1061
    %v1072 = vcombine.high %v1068, %v1068
    %v1074 = vcombine.high %v279, %v279
    %v1076 = vunpack.c.l.s4 1966171168
    %v1077 = vunpack.c.0.s8 %v1076
    %v1078 = vlaneseq
    %v1079 = vshrl.u32 %v1078, 7
    %v1080 = vsub.s32 %v1077, %v1079
    %v1081 = vrot.slane %v279, %v1080
    %v1083 = vunpack.c.l.s4 1966171168
    %v1084 = vunpack.c.0.s8 %v1083
    %v1085 = vlaneseq
    %v1086 = vshrl.u32 %v1085, 7
    %v1087 = vsub.s32 %v1084, %v1086
    %v1088 = vrot.slane %v1074, %v1087
    %v1089 = vcombine.high %v1081, %v1081
    %v1090 = vcombine.high %v1088, %v1088
    %v1092 = vunpack.c.l.s4 1966171168
    %v1093 = vunpack.c.0.s8 %v1092
    %v1094 = vlaneseq
    %v1095 = vshrl.u32 %v1094, 7
    %v1096 = vsub.s32 %v1093, %v1095
    %v1097 = vrot.slane %v1081, %v1096
    %v1099 = vunpack.c.l.s4 1966171168
    %v1100 = vunpack.c.0.s8 %v1099
    %v1101 = vlaneseq
    %v1102 = vshrl.u32 %v1101, 7
    %v1103 = vsub.s32 %v1100, %v1102
    %v1104 = vrot.slane %v1088, %v1103
    %v1106 = vunpack.c.l.s4 1966171168
    %v1107 = vunpack.c.0.s8 %v1106
    %v1108 = vlaneseq
    %v1109 = vshrl.u32 %v1108, 7
    %v1110 = vsub.s32 %v1107, %v1109
    %v1111 = vrot.slane %v1089, %v1110
    %v1113 = vunpack.c.l.s4 1966171168
    %v1114 = vunpack.c.0.s8 %v1113
    %v1115 = vlaneseq
    %v1116 = vshrl.u32 %v1115, 7
    %v1117 = vsub.s32 %v1114, %v1116
    %v1118 = vrot.slane %v1090, %v1117
    %v1119 = vcombine.high %v1097, %v1097
    %v1120 = vcombine.high %v1104, %v1104
    %v1121 = vcombine.high %v1111, %v1111
    %v1122 = vcombine.high %v1118, %v1118
    %s1123 = scalar_lea.vmem [#allocation7], 24
    %v1124 = vld [vmem:[%s1123] sm:$0xff]
    %s1125 = scalar_lea.vmem [#allocation8], 24
    %v1126 = vld [vmem:[%s1125] sm:$0xff]
    %v1127 = vlaneseq
    %v1128 = vshrl.u32 %v1127, 7
    %v1129 = vsub.s32 0, %v1128
    %v1130 = vrot.slane %v1047, %v1129
    %v1131 = vlaneseq
    %v1132 = vshrl.u32 %v1131, 7
    %v1133 = vsub.s32 0, %v1132
    %v1134 = vrot.slane %v1061, %v1133
    %v1135 = vlaneseq
    %v1136 = vshrl.u32 %v1135, 7
    %v1137 = vsub.s32 0, %v1136
    %v1138 = vrot.slane %v1069, %v1137
    %v1139 = vlaneseq
    %v1140 = vshrl.u32 %v1139, 7
    %v1141 = vsub.s32 0, %v1140
    %v1142 = vrot.slane %v1071, %v1141
    %v1143 = vlaneseq
    %v1144 = vshrl.u32 %v1143, 7
    %v1145 = vsub.s32 0, %v1144
    %v1146 = vrot.slane %v1054, %v1145
    %v1147 = vlaneseq
    %v1148 = vshrl.u32 %v1147, 7
    %v1149 = vsub.s32 0, %v1148
    %v1150 = vrot.slane %v1068, %v1149
    %v1151 = vlaneseq
    %v1152 = vshrl.u32 %v1151, 7
    %v1153 = vsub.s32 0, %v1152
    %v1154 = vrot.slane %v1070, %v1153
    %v1155 = vlaneseq
    %v1156 = vshrl.u32 %v1155, 7
    %v1157 = vsub.s32 0, %v1156
    %v1158 = vrot.slane %v1072, %v1157
    %v1167 = vmul.f32 %v1130, %v1124
    %v1168 = vmul.f32 %v1134, %v1124
    %v1169 = vmul.f32 %v1138, %v1124
    %v1170 = vmul.f32 %v1142, %v1124
    %v1171 = vmul.f32 %v1146, %v1124
    %v1172 = vmul.f32 %v1150, %v1124
    %v1173 = vmul.f32 %v1154, %v1124
    %v1174 = vmul.f32 %v1158, %v1124
    %v1175 = vadd.f32 %v983, %v1167
    %v1176 = vadd.f32 %v984, %v1168
    %v1177 = vadd.f32 %v985, %v1169
    %v1178 = vadd.f32 %v986, %v1170
    %v1179 = vadd.f32 %v987, %v1171
    %v1180 = vadd.f32 %v988, %v1172
    %v1181 = vadd.f32 %v989, %v1173
    %v1182 = vadd.f32 %v990, %v1174
    %v1183 = vlaneseq
    %v1184 = vshrl.u32 %v1183, 7
    %v1185 = vsub.s32 0, %v1184
    %v1186 = vrot.slane %v1097, %v1185
    %v1187 = vlaneseq
    %v1188 = vshrl.u32 %v1187, 7
    %v1189 = vsub.s32 0, %v1188
    %v1190 = vrot.slane %v1111, %v1189
    %v1191 = vlaneseq
    %v1192 = vshrl.u32 %v1191, 7
    %v1193 = vsub.s32 0, %v1192
    %v1194 = vrot.slane %v1119, %v1193
    %v1195 = vlaneseq
    %v1196 = vshrl.u32 %v1195, 7
    %v1197 = vsub.s32 0, %v1196
    %v1198 = vrot.slane %v1121, %v1197
    %v1199 = vlaneseq
    %v1200 = vshrl.u32 %v1199, 7
    %v1201 = vsub.s32 0, %v1200
    %v1202 = vrot.slane %v1104, %v1201
    %v1203 = vlaneseq
    %v1204 = vshrl.u32 %v1203, 7
    %v1205 = vsub.s32 0, %v1204
    %v1206 = vrot.slane %v1118, %v1205
    %v1207 = vlaneseq
    %v1208 = vshrl.u32 %v1207, 7
    %v1209 = vsub.s32 0, %v1208
    %v1210 = vrot.slane %v1120, %v1209
    %v1211 = vlaneseq
    %v1212 = vshrl.u32 %v1211, 7
    %v1213 = vsub.s32 0, %v1212
    %v1214 = vrot.slane %v1122, %v1213
    %v1223 = vmul.f32 %v1186, %v1126
    %v1224 = vmul.f32 %v1190, %v1126
    %v1225 = vmul.f32 %v1194, %v1126
    %v1226 = vmul.f32 %v1198, %v1126
    %v1227 = vmul.f32 %v1202, %v1126
    %v1228 = vmul.f32 %v1206, %v1126
    %v1229 = vmul.f32 %v1210, %v1126
    %v1230 = vmul.f32 %v1214, %v1126
    %v1231 = vsub.f32 %v1175, %v1223
    %v1232 = vsub.f32 %v1176, %v1224
    %v1233 = vsub.f32 %v1177, %v1225
    %v1234 = vsub.f32 %v1178, %v1226
    %v1235 = vsub.f32 %v1179, %v1227
    %v1236 = vsub.f32 %v1180, %v1228
    %v1237 = vsub.f32 %v1181, %v1229
    %v1238 = vsub.f32 %v1182, %v1230
    %v1239 = vmul.f32 %v1130, %v1126
    %v1240 = vmul.f32 %v1134, %v1126
    %v1241 = vmul.f32 %v1138, %v1126
    %v1242 = vmul.f32 %v1142, %v1126
    %v1243 = vmul.f32 %v1146, %v1126
    %v1244 = vmul.f32 %v1150, %v1126
    %v1245 = vmul.f32 %v1154, %v1126
    %v1246 = vmul.f32 %v1158, %v1126
    %v1247 = vadd.f32 %v1015, %v1239
    %v1248 = vadd.f32 %v1016, %v1240
    %v1249 = vadd.f32 %v1017, %v1241
    %v1250 = vadd.f32 %v1018, %v1242
    %v1251 = vadd.f32 %v1019, %v1243
    %v1252 = vadd.f32 %v1020, %v1244
    %v1253 = vadd.f32 %v1021, %v1245
    %v1254 = vadd.f32 %v1022, %v1246
    %v1255 = vmul.f32 %v1186, %v1124
    %v1256 = vmul.f32 %v1190, %v1124
    %v1257 = vmul.f32 %v1194, %v1124
    %v1258 = vmul.f32 %v1198, %v1124
    %v1259 = vmul.f32 %v1202, %v1124
    %v1260 = vmul.f32 %v1206, %v1124
    %v1261 = vmul.f32 %v1210, %v1124
    %v1262 = vmul.f32 %v1214, %v1124
    %v1263 = vadd.f32 %v1247, %v1255
    %v1264 = vadd.f32 %v1248, %v1256
    %v1265 = vadd.f32 %v1249, %v1257
    %v1266 = vadd.f32 %v1250, %v1258
    %v1267 = vadd.f32 %v1251, %v1259
    %v1268 = vadd.f32 %v1252, %v1260
    %v1269 = vadd.f32 %v1253, %v1261
    %v1270 = vadd.f32 %v1254, %v1262
    %v1271 = vpack.c.bf16 %v1232, %v1231
    %v1272 = vpack.c.bf16 %v1234, %v1233
    %v1273 = vpack.c.bf16 %v1236, %v1235
    %v1274 = vpack.c.bf16 %v1238, %v1237
    %v1275 = vpack.c.bf16 %v1264, %v1263
    %v1276 = vpack.c.bf16 %v1266, %v1265
    %v1277 = vpack.c.bf16 %v1268, %v1267
    %v1278 = vpack.c.bf16 %v1270, %v1269
    %v1279 = vld [vmem:[#allocation10] sm:$0xf]
    %v1280 = vld [vmem:[#allocation10 + $0x4] sm:$0xf]
    %v1281 = vld [vmem:[#allocation10 + $0x8] sm:$0xf]
    %v1282 = vld [vmem:[#allocation10 + $0xc] sm:$0xf]
    %v1283 = vld [vmem:[#allocation10 + $0x10] sm:$0xf]
    %v1284 = vld [vmem:[#allocation10 + $0x14] sm:$0xf]
    %v1285 = vld [vmem:[#allocation10 + $0x18] sm:$0xf]
    %v1286 = vld [vmem:[#allocation10 + $0x1c] sm:$0xf]
    %v1287 = vld [vmem:[#allocation10 + $0x20] sm:$0xf]
    %v1288 = vld [vmem:[#allocation10 + $0x24] sm:$0xf]
    %v1289 = vld [vmem:[#allocation10 + $0x28] sm:$0xf]
    %v1290 = vld [vmem:[#allocation10 + $0x2c] sm:$0xf]
    %v1291 = vld [vmem:[#allocation10 + $0x30] sm:$0xf]
    %v1292 = vld [vmem:[#allocation10 + $0x34] sm:$0xf]
    %v1293 = vld [vmem:[#allocation10 + $0x38] sm:$0xf]
    %v1294 = vld [vmem:[#allocation10 + $0x3c] sm:$0xf]
    %v1295 = vld [vmem:[#allocation11] sm:$0xf]
    %v1296 = vld [vmem:[#allocation11 + $0x4] sm:$0xf]
    %v1297 = vld [vmem:[#allocation11 + $0x8] sm:$0xf]
    %v1298 = vld [vmem:[#allocation11 + $0xc] sm:$0xf]
    %v1299 = vld [vmem:[#allocation11 + $0x10] sm:$0xf]
    %v1300 = vld [vmem:[#allocation11 + $0x14] sm:$0xf]
    %v1301 = vld [vmem:[#allocation11 + $0x18] sm:$0xf]
    %v1302 = vld [vmem:[#allocation11 + $0x1c] sm:$0xf]
    %v1303 = vld [vmem:[#allocation11 + $0x20] sm:$0xf]
    %v1304 = vld [vmem:[#allocation11 + $0x24] sm:$0xf]
    %v1305 = vld [vmem:[#allocation11 + $0x28] sm:$0xf]
    %v1306 = vld [vmem:[#allocation11 + $0x2c] sm:$0xf]
    %v1307 = vld [vmem:[#allocation11 + $0x30] sm:$0xf]
    %v1308 = vld [vmem:[#allocation11 + $0x34] sm:$0xf]
    %v1309 = vld [vmem:[#allocation11 + $0x38] sm:$0xf]
    %v1310 = vld [vmem:[#allocation11 + $0x3c] sm:$0xf]
    %v1327 = vunpack.c.l.b16 %v1295
    %v1328 = vunpack.c.l.b16 %v1296
    %v1329 = vunpack.c.l.b16 %v1297
    %v1330 = vunpack.c.l.b16 %v1298
    %v1331 = vunpack.c.l.b16 %v1299
    %v1332 = vunpack.c.l.b16 %v1300
    %v1333 = vunpack.c.l.b16 %v1301
    %v1334 = vunpack.c.l.b16 %v1302
    %v1335 = vunpack.c.l.b16 %v1303
    %v1336 = vunpack.c.l.b16 %v1304
    %v1337 = vunpack.c.l.b16 %v1305
    %v1338 = vunpack.c.l.b16 %v1306
    %v1339 = vunpack.c.l.b16 %v1307
    %v1340 = vunpack.c.l.b16 %v1308
    %v1341 = vunpack.c.l.b16 %v1309
    %v1342 = vunpack.c.l.b16 %v1310
    %v1343 = vpack.c.b16 %v1328, %v1327
    %v1344 = vpack.c.b16 %v1330, %v1329
    %v1345 = vpack.c.b16 %v1332, %v1331
    %v1346 = vpack.c.b16 %v1334, %v1333
    %v1347 = vpack.c.b16 %v1336, %v1335
    %v1348 = vpack.c.b16 %v1338, %v1337
    %v1349 = vpack.c.b16 %v1340, %v1339
    %v1350 = vpack.c.b16 %v1342, %v1341
    %1359 = vmatprep.subr.bf16.mxu0 0
    %1360 = vmatpush1.bf16.msra.mxu0 %v1343
    %1361 = vmatprep.subr.bf16.mxu0 0
    %1362 = vmatpush1.bf16.msra.mxu0 %v1344
    %1363 = vmatprep.subr.bf16.mxu0 0
    %1364 = vmatpush1.bf16.msra.mxu0 %v1345
    %1365 = vmatprep.subr.bf16.mxu0 0
    %1366 = vmatpush1.bf16.msra.mxu0 %v1346
    %1367 = vmatprep.subr.bf16.mxu0 0
    %1368 = vmatpush1.bf16.msra.mxu0 %v1347
    %1369 = vmatprep.subr.bf16.mxu0 0
    %1370 = vmatpush1.bf16.msra.mxu0 %v1348
    %1371 = vmatprep.subr.bf16.mxu0 0
    %1372 = vmatpush1.bf16.msra.mxu0 %v1349
    %1373 = vmatprep.subr.bf16.mxu0 0
    %1374 = vmatpush1.bf16.msra.mxu0 %v1350
    %1375 = vmatprep.subr.bf16.mxu0 0
    %1376 = vmatpush1.bf16.msra.mxu0 0
    %1377 = vmatprep.subr.bf16.mxu0 0
    %1378 = vmatpush1.bf16.msra.mxu0 0
    %1379 = vmatprep.subr.bf16.mxu0 0
    %1380 = vmatpush1.bf16.msra.mxu0 0
    %1381 = vmatprep.subr.bf16.mxu0 0
    %1382 = vmatpush1.bf16.msra.mxu0 0
    %1383 = vmatprep.subr.bf16.mxu0 0
    %1384 = vmatpush1.bf16.msra.mxu0 0
    %1385 = vmatprep.subr.bf16.mxu0 0
    %1386 = vmatpush1.bf16.msra.mxu0 0
    %1387 = vmatprep.subr.bf16.mxu0 0
    %1388 = vmatpush1.bf16.msra.mxu0 0
    %1389 = vmatprep.subr.bf16.mxu0 0
    %1390 = vmatpush1.bf16.msra.mxu0 0
    %1391 = vmatprep.mubr.bf16.mxu0 0
    %1392 = vmatmul.mubr.bf16.gmra.mrb[0].mxu0 %v1275
    %v1393 = vpop.f32.mrb[0].mxu0
    %v1394 = vadd.f32 0.0, %v1393
    %v1395 = vpop.f32.mrb[0].mxu0
    %v1396 = vpop.f32.mrb[0].mxu0
    %v1397 = vadd.f32 0.0, %v1396
    %v1398 = vpop.f32.mrb[0].mxu0
    %1399 = vmatprep.mubr.bf16.mxu0 0
    %1400 = vmatmul.mubr.bf16.gmra.mrb[0].mxu0 %v1276
    %v1401 = vpop.f32.mrb[0].mxu0
    %v1402 = vadd.f32 0.0, %v1401
    %v1403 = vpop.f32.mrb[0].mxu0
    %v1404 = vpop.f32.mrb[0].mxu0
    %v1405 = vadd.f32 0.0, %v1404
    %v1406 = vpop.f32.mrb[0].mxu0
    %1407 = vmatprep.mubr.bf16.mxu0 0
    %1408 = vmatmul.mubr.bf16.gmra.mrb[0].mxu0 %v1277
    %v1409 = vpop.f32.mrb[0].mxu0
    %v1410 = vadd.f32 0.0, %v1409
    %v1411 = vpop.f32.mrb[0].mxu0
    %v1412 = vpop.f32.mrb[0].mxu0
    %v1413 = vadd.f32 0.0, %v1412
    %v1414 = vpop.f32.mrb[0].mxu0
    %1415 = vmatprep.mubr.bf16.mxu0 0
    %1416 = vmatmul.mubr.bf16.gmra.mrb[0].mxu0 %v1278
    %v1417 = vpop.f32.mrb[0].mxu0
    %v1418 = vadd.f32 0.0, %v1417
    %v1419 = vpop.f32.mrb[0].mxu0
    %v1420 = vpop.f32.mrb[0].mxu0
    %v1421 = vadd.f32 0.0, %v1420
    %v1422 = vpop.f32.mrb[0].mxu0
    %1423 = vdwg.mxu0
    %v1440 = vunpack.c.l.b16 %v1279
    %v1441 = vunpack.c.l.b16 %v1280
    %v1442 = vunpack.c.l.b16 %v1281
    %v1443 = vunpack.c.l.b16 %v1282
    %v1444 = vunpack.c.l.b16 %v1283
    %v1445 = vunpack.c.l.b16 %v1284
    %v1446 = vunpack.c.l.b16 %v1285
    %v1447 = vunpack.c.l.b16 %v1286
    %v1448 = vunpack.c.l.b16 %v1287
    %v1449 = vunpack.c.l.b16 %v1288
    %v1450 = vunpack.c.l.b16 %v1289
    %v1451 = vunpack.c.l.b16 %v1290
    %v1452 = vunpack.c.l.b16 %v1291
    %v1453 = vunpack.c.l.b16 %v1292
    %v1454 = vunpack.c.l.b16 %v1293
    %v1455 = vunpack.c.l.b16 %v1294
    %v1456 = vpack.c.b16 %v1441, %v1440
    %v1457 = vpack.c.b16 %v1443, %v1442
    %v1458 = vpack.c.b16 %v1445, %v1444
    %v1459 = vpack.c.b16 %v1447, %v1446
    %v1460 = vpack.c.b16 %v1449, %v1448
    %v1461 = vpack.c.b16 %v1451, %v1450
    %v1462 = vpack.c.b16 %v1453, %v1452
    %v1463 = vpack.c.b16 %v1455, %v1454
    %1472 = vmatprep.subr.bf16.mxu0 0
    %1473 = vmatpush1.bf16.msra.mxu0 %v1456
    %1474 = vmatprep.subr.bf16.mxu0 0
    %1475 = vmatpush1.bf16.msra.mxu0 %v1457
    %1476 = vmatprep.subr.bf16.mxu0 0
    %1477 = vmatpush1.bf16.msra.mxu0 %v1458
    %1478 = vmatprep.subr.bf16.mxu0 0
    %1479 = vmatpush1.bf16.msra.mxu0 %v1459
    %1480 = vmatprep.subr.bf16.mxu0 0
    %1481 = vmatpush1.bf16.msra.mxu0 %v1460
    %1482 = vmatprep.subr.bf16.mxu0 0
    %1483 = vmatpush1.bf16.msra.mxu0 %v1461
    %1484 = vmatprep.subr.bf16.mxu0 0
    %1485 = vmatpush1.bf16.msra.mxu0 %v1462
    %1486 = vmatprep.subr.bf16.mxu0 0
    %1487 = vmatpush1.bf16.msra.mxu0 %v1463
    %1488 = vmatprep.subr.bf16.mxu0 0
    %1489 = vmatpush1.bf16.msra.mxu0 0
    %1490 = vmatprep.subr.bf16.mxu0 0
    %1491 = vmatpush1.bf16.msra.mxu0 0
    %1492 = vmatprep.subr.bf16.mxu0 0
    %1493 = vmatpush1.bf16.msra.mxu0 0
    %1494 = vmatprep.subr.bf16.mxu0 0
    %1495 = vmatpush1.bf16.msra.mxu0 0
    %1496 = vmatprep.subr.bf16.mxu0 0
    %1497 = vmatpush1.bf16.msra.mxu0 0
    %1498 = vmatprep.subr.bf16.mxu0 0
    %1499 = vmatpush1.bf16.msra.mxu0 0
    %1500 = vmatprep.subr.bf16.mxu0 0
    %1501 = vmatpush1.bf16.msra.mxu0 0
    %1502 = vmatprep.subr.bf16.mxu0 0
    %1503 = vmatpush1.bf16.msra.mxu0 0
    %1504 = vmatprep.mubr.bf16.mxu0 0
    %1505 = vmatmul.mubr.bf16.gmra.mrb[0].mxu0 %v1271
    %v1506 = vpop.f32.mrb[0].mxu0
    %v1507 = vadd.f32 %v1394, %v1506
    %v1508 = vpop.f32.mrb[0].mxu0
    %v1509 = vpop.f32.mrb[0].mxu0
    %v1510 = vadd.f32 %v1397, %v1509
    %v1511 = vpop.f32.mrb[0].mxu0
    %1512 = vmatprep.mubr.bf16.mxu0 0
    %1513 = vmatmul.mubr.bf16.gmra.mrb[0].mxu0 %v1272
    %v1514 = vpop.f32.mrb[0].mxu0
    %v1515 = vadd.f32 %v1402, %v1514
    %v1516 = vpop.f32.mrb[0].mxu0
    %v1517 = vpop.f32.mrb[0].mxu0
    %v1518 = vadd.f32 %v1405, %v1517
    %v1519 = vpop.f32.mrb[0].mxu0
    %1520 = vmatprep.mubr.bf16.mxu0 0
    %1521 = vmatmul.mubr.bf16.gmra.mrb[0].mxu0 %v1273
    %v1522 = vpop.f32.mrb[0].mxu0
    %v1523 = vadd.f32 %v1410, %v1522
    %v1524 = vpop.f32.mrb[0].mxu0
    %v1525 = vpop.f32.mrb[0].mxu0
    %v1526 = vadd.f32 %v1413, %v1525
    %v1527 = vpop.f32.mrb[0].mxu0
    %1528 = vmatprep.mubr.bf16.mxu0 0
    %1529 = vmatmul.mubr.bf16.gmra.mrb[0].mxu0 %v1274
    %v1530 = vpop.f32.mrb[0].mxu0
    %v1531 = vadd.f32 %v1418, %v1530
    %v1532 = vpop.f32.mrb[0].mxu0
    %v1533 = vpop.f32.mrb[0].mxu0
    %v1534 = vadd.f32 %v1421, %v1533
    %v1535 = vpop.f32.mrb[0].mxu0
    %1536 = vdwg.mxu0
    %v1537 = vld [vmem:[%s7] sm:$0xf]
    %v1538 = vld [vmem:[%s1] sm:$0xff]
    %v1539 = vld [vmem:[%s1 + $0x8] sm:$0xff]
    %v1542 = vcombine.high %v1538, %v1538
    %v1544 = vunpack.c.l.s4 1983009808
    %v1545 = vunpack.c.0.s8 %v1544
    %v1546 = vlaneseq
    %v1547 = vshrl.u32 %v1546, 7
    %v1548 = vsub.s32 %v1545, %v1547
    %v1549 = vrot.slane %v1538, %v1548
    %v1551 = vunpack.c.l.s4 1983009808
    %v1552 = vunpack.c.0.s8 %v1551
    %v1553 = vlaneseq
    %v1554 = vshrl.u32 %v1553, 7
    %v1555 = vsub.s32 %v1552, %v1554
    %v1556 = vrot.slane %v1542, %v1555
    %v1557 = vcombine.high %v1549, %v1549
    %v1558 = vcombine.high %v1556, %v1556
    %v1559 = vcombine.high %v1539, %v1539
    %v1561 = vunpack.c.l.s4 1983009808
    %v1562 = vunpack.c.0.s8 %v1561
    %v1563 = vlaneseq
    %v1564 = vshrl.u32 %v1563, 7
    %v1565 = vsub.s32 %v1562, %v1564
    %v1566 = vrot.slane %v1539, %v1565
    %v1568 = vunpack.c.l.s4 1983009808
    %v1569 = vunpack.c.0.s8 %v1568
    %v1570 = vlaneseq
    %v1571 = vshrl.u32 %v1570, 7
    %v1572 = vsub.s32 %v1569, %v1571
    %v1573 = vrot.slane %v1559, %v1572
    %v1574 = vcombine.high %v1566, %v1566
    %v1575 = vcombine.high %v1573, %v1573
    %vm1576 = vcmask 31744
    %v1578 = vsel %vm1576, %v1537, 0
    %vm1580 = vcmask 1041408
    %v1582 = vsel %vm1580, %v1549, 0
    %v1585 = vsel %vm1580, %v1557, 0
    %v1588 = vsel %vm1580, %v1556, 0
    %v1591 = vsel %vm1580, %v1558, 0
    %v1594 = vsel %vm1580, %v1566, 0
    %v1597 = vsel %vm1580, %v1574, 0
    %v1600 = vsel %vm1580, %v1573, 0
    %v1603 = vsel %vm1580, %v1575, 0
    %1605 = vmatprep.subr.bf16.mxu0 %v1585
    %1606 = vmatpush1.bf16.msra.mxu0 %v1582
    %1607 = vmatprep.subr.bf16.mxu0 0
    %1608 = vmatpush1.bf16.msra.mxu0 0
    %1609 = vmatprep.subr.bf16.mxu0 0
    %1610 = vmatpush1.bf16.msra.mxu0 0
    %1611 = vmatprep.subr.bf16.mxu0 0
    %1612 = vmatpush1.bf16.msra.mxu0 0
    %1613 = vmatprep.subr.bf16.mxu0 0
    %1614 = vmatpush1.bf16.msra.mxu0 0
    %1615 = vmatprep.subr.bf16.mxu0 0
    %1616 = vmatpush1.bf16.msra.mxu0 0
    %1617 = vmatprep.subr.bf16.mxu0 0
    %1618 = vmatpush1.bf16.msra.mxu0 0
    %1619 = vmatprep.subr.bf16.mxu0 0
    %1620 = vmatpush1.bf16.msra.mxu0 0
    %1621 = vmatprep.subr.bf16.mxu0 0
    %1622 = vmatpush1.bf16.msra.mxu0 0
    %1623 = vmatprep.subr.bf16.mxu0 0
    %1624 = vmatpush1.bf16.msra.mxu0 0
    %1625 = vmatprep.subr.bf16.mxu0 0
    %1626 = vmatpush1.bf16.msra.mxu0 0
    %1627 = vmatprep.subr.bf16.mxu0 0
    %1628 = vmatpush1.bf16.msra.mxu0 0
    %1629 = vmatprep.subr.bf16.mxu0 0
    %1630 = vmatpush1.bf16.msra.mxu0 0
    %1631 = vmatprep.subr.bf16.mxu0 0
    %1632 = vmatpush1.bf16.msra.mxu0 0
    %1633 = vmatprep.subr.bf16.mxu0 0
    %1634 = vmatpush1.bf16.msra.mxu0 0
    %1635 = vmatprep.subr.bf16.mxu0 0
    %1636 = vmatpush1.bf16.msra.mxu0 0
    %1637 = vmatprep.mubr.bf16.mxu0 0
    %1638 = vmatmul.mubr.bf16.gmra.mrb[0].mxu0 %v1578
    %v1639 = vpop.f32.mrb[0].mxu0
    %v1640 = vadd.f32 0.0, %v1639
    %v1641 = vpop.f32.mrb[0].mxu0
    %v1642 = vadd.f32 0.0, %v1641
    %v1643 = vpop.f32.mrb[0].mxu0
    %v1644 = vpop.f32.mrb[0].mxu0
    %1645 = vdwg.mxu0
    %1646 = vmatprep.subr.bf16.mxu0 %v1591
    %1647 = vmatpush1.bf16.msra.mxu0 %v1588
    %1648 = vmatprep.subr.bf16.mxu0 0
    %1649 = vmatpush1.bf16.msra.mxu0 0
    %1650 = vmatprep.subr.bf16.mxu0 0
    %1651 = vmatpush1.bf16.msra.mxu0 0
    %1652 = vmatprep.subr.bf16.mxu0 0
    %1653 = vmatpush1.bf16.msra.mxu0 0
    %1654 = vmatprep.subr.bf16.mxu0 0
    %1655 = vmatpush1.bf16.msra.mxu0 0
    %1656 = vmatprep.subr.bf16.mxu0 0
    %1657 = vmatpush1.bf16.msra.mxu0 0
    %1658 = vmatprep.subr.bf16.mxu0 0
    %1659 = vmatpush1.bf16.msra.mxu0 0
    %1660 = vmatprep.subr.bf16.mxu0 0
    %1661 = vmatpush1.bf16.msra.mxu0 0
    %1662 = vmatprep.subr.bf16.mxu0 0
    %1663 = vmatpush1.bf16.msra.mxu0 0
    %1664 = vmatprep.subr.bf16.mxu0 0
    %1665 = vmatpush1.bf16.msra.mxu0 0
    %1666 = vmatprep.subr.bf16.mxu0 0
    %1667 = vmatpush1.bf16.msra.mxu0 0
    %1668 = vmatprep.subr.bf16.mxu0 0
    %1669 = vmatpush1.bf16.msra.mxu0 0
    %1670 = vmatprep.subr.bf16.mxu0 0
    %1671 = vmatpush1.bf16.msra.mxu0 0
    %1672 = vmatprep.subr.bf16.mxu0 0
    %1673 = vmatpush1.bf16.msra.mxu0 0
    %1674 = vmatprep.subr.bf16.mxu0 0
    %1675 = vmatpush1.bf16.msra.mxu0 0
    %1676 = vmatprep.subr.bf16.mxu0 0
    %1677 = vmatpush1.bf16.msra.mxu0 0
    %1678 = vmatprep.mubr.bf16.mxu0 0
    %1679 = vmatmul.mubr.bf16.gmra.mrb[0].mxu0 %v1578
    %v1680 = vpop.f32.mrb[0].mxu0
    %v1681 = vadd.f32 0.0, %v1680
    %v1682 = vpop.f32.mrb[0].mxu0
    %v1683 = vadd.f32 0.0, %v1682
    %v1684 = vpop.f32.mrb[0].mxu0
    %v1685 = vpop.f32.mrb[0].mxu0
    %1686 = vdwg.mxu0
    %1687 = vmatprep.subr.bf16.mxu0 %v1597
    %1688 = vmatpush1.bf16.msra.mxu0 %v1594
    %1689 = vmatprep.subr.bf16.mxu0 0
    %1690 = vmatpush1.bf16.msra.mxu0 0
    %1691 = vmatprep.subr.bf16.mxu0 0
    %1692 = vmatpush1.bf16.msra.mxu0 0
    %1693 = vmatprep.subr.bf16.mxu0 0
    %1694 = vmatpush1.bf16.msra.mxu0 0
    %1695 = vmatprep.subr.bf16.mxu0 0
    %1696 = vmatpush1.bf16.msra.mxu0 0
    %1697 = vmatprep.subr.bf16.mxu0 0
    %1698 = vmatpush1.bf16.msra.mxu0 0
    %1699 = vmatprep.subr.bf16.mxu0 0
    %1700 = vmatpush1.bf16.msra.mxu0 0
    %1701 = vmatprep.subr.bf16.mxu0 0
    %1702 = vmatpush1.bf16.msra.mxu0 0
    %1703 = vmatprep.subr.bf16.mxu0 0
    %1704 = vmatpush1.bf16.msra.mxu0 0
    %1705 = vmatprep.subr.bf16.mxu0 0
    %1706 = vmatpush1.bf16.msra.mxu0 0
    %1707 = vmatprep.subr.bf16.mxu0 0
    %1708 = vmatpush1.bf16.msra.mxu0 0
    %1709 = vmatprep.subr.bf16.mxu0 0
    %1710 = vmatpush1.bf16.msra.mxu0 0
    %1711 = vmatprep.subr.bf16.mxu0 0
    %1712 = vmatpush1.bf16.msra.mxu0 0
    %1713 = vmatprep.subr.bf16.mxu0 0
    %1714 = vmatpush1.bf16.msra.mxu0 0
    %1715 = vmatprep.subr.bf16.mxu0 0
    %1716 = vmatpush1.bf16.msra.mxu0 0
    %1717 = vmatprep.subr.bf16.mxu0 0
    %1718 = vmatpush1.bf16.msra.mxu0 0
    %1719 = vmatprep.mubr.bf16.mxu0 0
    %1720 = vmatmul.mubr.bf16.gmra.mrb[0].mxu0 %v1578
    %v1721 = vpop.f32.mrb[0].mxu0
    %v1722 = vadd.f32 0.0, %v1721
    %v1723 = vpop.f32.mrb[0].mxu0
    %v1724 = vadd.f32 0.0, %v1723
    %v1725 = vpop.f32.mrb[0].mxu0
    %v1726 = vpop.f32.mrb[0].mxu0
    %1727 = vdwg.mxu0
    %1728 = vmatprep.subr.bf16.mxu0 %v1603
    %1729 = vmatpush1.bf16.msra.mxu0 %v1600
    %1730 = vmatprep.subr.bf16.mxu0 0
    %1731 = vmatpush1.bf16.msra.mxu0 0
    %1732 = vmatprep.subr.bf16.mxu0 0
    %1733 = vmatpush1.bf16.msra.mxu0 0
    %1734 = vmatprep.subr.bf16.mxu0 0
    %1735 = vmatpush1.bf16.msra.mxu0 0
    %1736 = vmatprep.subr.bf16.mxu0 0
    %1737 = vmatpush1.bf16.msra.mxu0 0
    %1738 = vmatprep.subr.bf16.mxu0 0
    %1739 = vmatpush1.bf16.msra.mxu0 0
    %1740 = vmatprep.subr.bf16.mxu0 0
    %1741 = vmatpush1.bf16.msra.mxu0 0
    %1742 = vmatprep.subr.bf16.mxu0 0
    %1743 = vmatpush1.bf16.msra.mxu0 0
    %1744 = vmatprep.subr.bf16.mxu0 0
    %1745 = vmatpush1.bf16.msra.mxu0 0
    %1746 = vmatprep.subr.bf16.mxu0 0
    %1747 = vmatpush1.bf16.msra.mxu0 0
    %1748 = vmatprep.subr.bf16.mxu0 0
    %1749 = vmatpush1.bf16.msra.mxu0 0
    %1750 = vmatprep.subr.bf16.mxu0 0
    %1751 = vmatpush1.bf16.msra.mxu0 0
    %1752 = vmatprep.subr.bf16.mxu0 0
    %1753 = vmatpush1.bf16.msra.mxu0 0
    %1754 = vmatprep.subr.bf16.mxu0 0
    %1755 = vmatpush1.bf16.msra.mxu0 0
    %1756 = vmatprep.subr.bf16.mxu0 0
    %1757 = vmatpush1.bf16.msra.mxu0 0
    %1758 = vmatprep.subr.bf16.mxu0 0
    %1759 = vmatpush1.bf16.msra.mxu0 0
    %1760 = vmatprep.mubr.bf16.mxu0 0
    %1761 = vmatmul.mubr.bf16.gmra.mrb[0].mxu0 %v1578
    %v1762 = vpop.f32.mrb[0].mxu0
    %v1763 = vadd.f32 0.0, %v1762
    %v1764 = vpop.f32.mrb[0].mxu0
    %v1765 = vadd.f32 0.0, %v1764
    %v1766 = vpop.f32.mrb[0].mxu0
    %v1767 = vpop.f32.mrb[0].mxu0
    %1768 = vdwg.mxu0
    %v1769 = vld [vmem:[%s8] sm:$0xff]
    %v1770 = vadd.f32 %v1507, %v1640
    %1772 = vset.pattern.permute.xlu0 0
    %1773 = vperm.xlu0 %1772, %v1769
    %v1774 = vpop.permute.xlu0 %1773
    %v1776 = vadd.f32 %v1770, %v1774
    %v1777 = vtanh.pop %v1776
    %1778 = vst [vmem:[#allocation13] sm:$0xff] %v1777
    %v1779 = vadd.f32 %v1510, %v1642
    %v1780 = vadd.f32 %v1779, %v1774
    %v1781 = vtanh.pop %v1780
    %1782 = vst [vmem:[#allocation13 + $0x8] sm:$0xff] %v1781
    %v1783 = vadd.f32 %v1515, %v1681
    %v1784 = vadd.f32 %v1783, %v1774
    %v1785 = vtanh.pop %v1784
    %1786 = vst [vmem:[#allocation13 + $0x10] sm:$0xff] %v1785
    %v1787 = vadd.f32 %v1518, %v1683
    %v1788 = vadd.f32 %v1787, %v1774
    %v1789 = vtanh.pop %v1788
    %1790 = vst [vmem:[#allocation13 + $0x18] sm:$0xff] %v1789
    %v1791 = vadd.f32 %v1523, %v1722
    %v1792 = vadd.f32 %v1791, %v1774
    %v1793 = vtanh.pop %v1792
    %1794 = vst [vmem:[#allocation13 + $0x20] sm:$0xff] %v1793
    %v1795 = vadd.f32 %v1526, %v1724
    %v1796 = vadd.f32 %v1795, %v1774
    %v1797 = vtanh.pop %v1796
    %1798 = vst [vmem:[#allocation13 + $0x28] sm:$0xff] %v1797
    %v1799 = vadd.f32 %v1531, %v1763
    %v1800 = vadd.f32 %v1799, %v1774
    %v1801 = vtanh.pop %v1800
    %1802 = vst [vmem:[#allocation13 + $0x30] sm:$0xff] %v1801
    %v1803 = vadd.f32 %v1534, %v1765
    %v1804 = vadd.f32 %v1803, %v1774
    %v1805 = vtanh.pop %v1804
    %1806 = vst [vmem:[#allocation13 + $0x38] sm:$0xff] %v1805
    // Predicated region
    $region62: #{tpu_custom_call.1} parent=1 // pred_check
      _
    $region63: #{tpu_custom_call.1} parent=1 // pred_check_branch
      %1808 = sbr.rel (0) target = $region65
    $region64: #{tpu_custom_call.1} parent=1 // pred_region
      %s1810 = ssub.s32 1024, 1024
      %1811 = vsyncadd [#allocation4], %s1810
      %s1812 = sshll.u32 [#allocation13], 4
      %s1813 = int_to_ptr.vmem [resolvable:$true] %s1812
      %1818 = dma.vmem_to_hbm [thread:$0]  %s1813, 1024, %s9, [#allocation4], 128, 128, 8
    $region65: #{tpu_custom_call.1} parent=1 // pred_fallthru
      _
    // Predicated region
    $region66: #{tpu_custom_call.1} parent=1 // pred_check
      _
    $region67: #{tpu_custom_call.1} parent=1 // pred_check_branch
      %1820 = sbr.rel (0) target = $region69
    $region68: #{tpu_custom_call.1} parent=1 // pred_region
      %1821 = dma.done [#allocation4], 1024
    $region69: #{tpu_custom_call.1} parent=1 // pred_fallthru
      _
    %1822 = vsyncpa [#allocation3], 1
    %1823 = vsyncpa [#allocation6], 1
    %1824 = vsyncpa [#allocation9], 1
    %1825 = vsyncpa [#allocation12], 1
    %1826 = vsyncpa [#allocation4], 1

</llo_original>
